<compile_context>
chip_gen: v5e
topology: v5e:2x2
jax: 0.10.0
libtpu: 0.0.40
codegen_flags: <defaults>
</compile_context>

<pallas_src>
import functools

import jax
import jax.numpy as jnp
from jax.experimental import pallas as pl
from jax.experimental.pallas import tpu as pltpu

NUM_CLASSES = 9
SCALE_XY = 10.0   # = 1 / anchors.scale_xy  (anchors.scale_xy = 0.1)
SCALE_WH = 5.0    # = 1 / anchors.scale_wh  (anchors.scale_wh = 0.2)


def _ssd_focal_loss_kernel(anchors_ref, bbox_ref, confs_ref, gtbox_ref,
                           labels_ref, out_ref,
                           acc_ce, acc_fc, acc_reg, acc_pos,
                           *, na_real, needs_mask):
    s = pl.program_id(1)
    n_steps = pl.num_programs(1)

    # ---- reset the per-chunk accumulators at the start of each chunk ----
    @pl.when(s == 0)
    def _init():
        acc_ce[...] = jnp.zeros_like(acc_ce)
        acc_fc[...] = jnp.zeros_like(acc_fc)
        acc_reg[...] = jnp.zeros_like(acc_reg)
        acc_pos[...] = jnp.zeros_like(acc_pos)

    confs = confs_ref[...].astype(jnp.float32)            # [B, C, T]
    labels = labels_ref[...]                               # [B, T] int32
    B, C, T = confs.shape

    # ---- softmax statistics over the class axis (dim=1) ----
    m = jnp.max(confs, axis=1)                             # [B, T]
    x = confs - m[:, None, :]                              # [B, C, T]
    e = jnp.exp(x)                                         # EUP
    denom = jnp.sum(e, axis=1)                             # [B, T]
    log_denom = jnp.log(denom)                             # EUP

    # ---- collapse to the label class before any further full-C work ----
    class_ids = jax.lax.broadcasted_iota(jnp.int32, (B, C, T), 1)
    yk = class_ids == labels[:, None, :]                   # one-hot mask
    x_label = jnp.sum(jnp.where(yk, x, 0.0), axis=1)       # [B, T]
    logp_label = x_label - log_denom                       # log softmax @ label
    p_label = jnp.exp(logp_label)                          # softmax @ label (exact)

    if needs_mask:
        # Anchors beyond the real count are zero-padded; keep them out of the
        # CE/focal sums (reg/pos are already safe: padded labels are 0).
        start = (pl.program_id(0) * n_steps + s) * T
        lane = jax.lax.broadcasted_iota(jnp.int32, (B, T), 1)
        logp_label = jnp.where(start + lane < na_real, logp_label, 0.0)

    alpha = jnp.where(labels == 0, jnp.float32(0.01), jnp.float32(1.0))
    om = 1.0 - p_label
    acc_ce[...] += logp_label
    acc_fc[...] += alpha * (om * om) * logp_label

    # ---- localization targets (_loc_vec) + masked SmoothL1 ----
    anch = anchors_ref[...].astype(jnp.float32)            # [1, 4, T]: ax, ay, 1/aw, 1/ah
    a_xy = anch[:, :2, :]
    inv_wh = anch[:, 2:, :]                                 # precomputed: no divide in kernel
    gt = gtbox_ref[...].astype(jnp.float32)                 # [B, 4, T]  xywh
    gxy = SCALE_XY * (gt[:, :2, :] - a_xy) * inv_wh
    gwh = SCALE_WH * jnp.log(gt[:, 2:, :] * inv_wh)
    bbox = bbox_ref[...].astype(jnp.float32)                # [B, 4, T]

    def _sl1(pred, tgt):
        d = jnp.abs(pred - tgt)
        return jnp.where(d < 1.0, 0.5 * d * d, d - 0.5)     # SmoothL1, beta=1

    pos = labels > 0                                         # [B, T]
    acc_reg[...] += jnp.where(pos[:, None, :],
                              _sl1(bbox[:, :2, :], gxy) + _sl1(bbox[:, 2:, :], gwh),
                              0.0)
    acc_pos[...] += jnp.where(pos, 1.0, 0.0)

    # ---- one cross-lane reduction + lane packing per chunk ----
    @pl.when(s == n_steps - 1)
    def _finalize():
        ce = -jnp.sum(acc_ce[...])
        fc = -jnp.sum(acc_fc[...])
        reg = jnp.sum(acc_reg[...])
        npos = jnp.sum(acc_pos[...])
        lane = jax.lax.broadcasted_iota(jnp.int32, out_ref.shape, 2)
        out_ref[...] = jnp.where(lane == 0, ce,
                       jnp.where(lane == 1, fc,
                       jnp.where(lane == 2, reg,
                       jnp.where(lane == 3, npos, 0.0))))


def _pad_up(n, m):
    return -(-n // m) * m


def _vmem_bytes_estimate(batch, tile, in_itemsize):
    """Conservative per-step VMEM bytes: double-buffered inputs + scratch + temps."""
    sub_in = 16 if in_itemsize == 2 else 8                    # sublane padding of inputs
    conf_blk = batch * _pad_up(NUM_CLASSES, sub_in) * tile * in_itemsize
    box_blk = 2 * batch * _pad_up(4, sub_in) * tile * in_itemsize   # bbox + gt
    lab_blk = _pad_up(batch, 8) * tile * 4
    anc_blk = _pad_up(4, 8) * tile * 4
    inputs = 2 * (conf_blk + box_blk + lab_blk + anc_blk)     # double buffered
    scratch = tile * 4 * (3 * _pad_up(batch, 8) + batch * _pad_up(2, 8))
    temps = (6 * batch * _pad_up(NUM_CLASSES, 8) * tile * 4   # f32 class-path temporaries
             + 3 * batch * _pad_up(4, 8) * tile * 4)          # f32 reg-path temporaries
    return inputs + scratch + temps


def _num_tensorcores():
    """2 TensorCores per JAX device on megacore (v4/v5p) and v7x, else 1."""
    try:
        kind = jax.devices()[0].device_kind.lower()
    except Exception:
        return 1
    if "lite" in kind or "v5e" in kind or "v6" in kind:
        return 1
    if "v4" in kind or "v5p" in kind or "v7" in kind or "7x" in kind:
        return 2
    return 1


def _vmem_budget():
    """(tile-picker budget, vmem_limit_bytes or None) based on physical VMEM."""
    phys = 64 << 20
    try:
        info = pltpu.get_tpu_info()
        phys = int(getattr(info, "vmem_capacity_bytes", phys)) or phys
    except Exception:
        pass
    if phys >= (100 << 20):            # v5e / v6e: 128 MiB physical VMEM
        return 40 << 20, 64 << 20
    return 20 << 20, None              # v7x (64 MiB per TC) or unknown: stay <= 32 MiB default


def _choose_tiling(num_anchors, batch, in_itemsize, n_par, budget):
    """Largest anchor tile that fits the VMEM budget with <=1/8 pad waste."""
    fallback = None
    for tile in (8192, 4096, 2048, 1024, 512, 256, 128):
        if _vmem_bytes_estimate(batch, tile, in_itemsize) > budget:
            continue
        chunk = n_par * tile
        na_pad = _pad_up(num_anchors, chunk)
        if fallback is None or na_pad < fallback[1]:
            fallback = (tile, na_pad)
        if (na_pad - num_anchors) * 8 <= na_pad:
            return tile, na_pad
    if fallback is None:
        raise ValueError("batch size too large for the VMEM tile budget")
    return fallback


def ssd_focal_loss_box(bbox_delta, confs, gt_bbox, gt_labels, anchors, *,
                       gt_bbox_transposed=False):
    """bbox_delta: [B,4,NA], confs: [B,C,NA], gt_bbox: [B,NA,4] (or [B,4,NA] if
    gt_bbox_transposed=True), gt_labels: [B,NA] int, anchors: [1,4,NA] xywh.
    Inputs may be bf16; compute is f32 inside the kernel."""
    B, _, NA = bbox_delta.shape
    C = confs.shape[1]
    assert C == NUM_CLASSES

    # Passing gt_bbox already as [B,4,NA] (gt_bbox_transposed=True) avoids an
    # extra HBM read+write of gt_bbox by XLA before this mem/VALU-bound kernel.
    gt_bbox_t = gt_bbox if gt_bbox_transposed else jnp.transpose(gt_bbox, (0, 2, 1))
    gt_labels = gt_labels.astype(jnp.int32)

    # Anchor features [ax, ay, 1/aw, 1/ah]: the kernel never divides.
    anchors_f = anchors.astype(jnp.float32)
    anchors_aug = jnp.concatenate(
        [anchors_f[:, :2, :], 1.0 / anchors_f[:, 2:, :]], axis=1)   # [1, 4, NA]

    n_par = _num_tensorcores()
    budget, vmem_limit = _vmem_budget()
    tile, na_pad = _choose_tiling(NA, B, jnp.dtype(confs.dtype).itemsize, n_par, budget)
    steps = na_pad // (n_par * tile)

    if na_pad != NA:
        pad = na_pad - NA
        pad3 = ((0, 0), (0, 0), (0, pad))
        bbox_delta = jnp.pad(bbox_delta, pad3)
        confs = jnp.pad(confs, pad3)
        gt_bbox_t = jnp.pad(gt_bbox_t, pad3, constant_values=1.0)
        anchors_aug = jnp.pad(anchors_aug, pad3, constant_values=1.0)
        gt_labels = jnp.pad(gt_labels, ((0, 0), (0, pad)))

    stream_kwargs = {}
    if tile <= 512:
        # Small tiles (large batches / heavy padding) expose per-step DMA
        # latency, especially on v5e -- deepen prefetch on the big streams.
        stream_kwargs = dict(pipeline_mode=pl.Buffered(3))

    cp_kwargs = dict(dimension_semantics=("parallel", "arbitrary"))
    if vmem_limit is not None:
        cp_kwargs["vmem_limit_bytes"] = vmem_limit

    kern = functools.partial(_ssd_focal_loss_kernel,
                             na_real=NA, needs_mask=(na_pad != NA))

    out = pl.pallas_call(
        kern,
        out_shape=jax.ShapeDtypeStruct((n_par, 8, 128), jnp.float32),
        grid_spec=pltpu.PrefetchScalarGridSpec(
            num_scalar_prefetch=0,
            grid=(n_par, steps),
            in_specs=[
                pl.BlockSpec((1, 4, tile), lambda p, s: (0, 0, p * steps + s)),   # anchors
                pl.BlockSpec((B, 4, tile), lambda p, s: (0, 0, p * steps + s),
                             **stream_kwargs),                                     # bbox_delta
                pl.BlockSpec((B, C, tile), lambda p, s: (0, 0, p * steps + s),
                             **stream_kwargs),                                     # confs
                pl.BlockSpec((B, 4, tile), lambda p, s: (0, 0, p * steps + s)),    # gt_bbox (t)
                pl.BlockSpec((B, tile),    lambda p, s: (0, p * steps + s)),       # gt_labels
            ],
            out_specs=pl.BlockSpec((1, 8, 128), lambda p, s: (p, 0, 0)),  # per-chunk row
            scratch_shapes=[
                pltpu.VMEM((B, tile), jnp.float32),      # acc_ce
                pltpu.VMEM((B, tile), jnp.float32),      # acc_fc
                pltpu.VMEM((B, 2, tile), jnp.float32),   # acc_reg
                pltpu.VMEM((B, tile), jnp.float32),      # acc_pos
            ],
        ),
        compiler_params=pltpu.CompilerParams(**cp_kwargs),
    )(anchors_aug, bbox_delta, confs, gt_bbox_t, gt_labels)

    ce_sum = jnp.sum(out[:, 0, 0])
    fc_sum = jnp.sum(out[:, 0, 1])
    reg_sum = jnp.sum(out[:, 0, 2])
    num_pos = jnp.sum(out[:, 0, 3])

    # NOTE: faithful to the PyTorch module -- no guard for num_pos == 0
    # (a batch with zero positive anchors yields inf/nan, as in torch).
    total_loss = reg_sum / num_pos + fc_sum / num_pos
    to_log = dict(regression_loss=reg_sum / num_pos,
                  classification_loss=ce_sum / num_pos,
                  total_loss=total_loss)
    return total_loss, to_log


def _reference(bbox_delta, confs, gt_bbox, gt_labels, anchors):
    """Pure-JAX reference mirroring the PyTorch forward (f32 math)."""
    bbox_delta = bbox_delta.astype(jnp.float32)
    confs = confs.astype(jnp.float32)
    gt = jnp.transpose(gt_bbox, (0, 2, 1)).astype(jnp.float32)
    anchors = anchors.astype(jnp.float32)
    logp = jax.nn.log_softmax(confs, axis=1)
    p = jnp.exp(logp)
    yk = jax.nn.one_hot(gt_labels, NUM_CLASSES, axis=1, dtype=jnp.float32)
    ce = -jnp.sum(yk * logp)
    alpha = jnp.array([0.01] + [1.0] * (NUM_CLASSES - 1), jnp.float32).reshape(1, -1, 1)
    fc = -jnp.sum(alpha * (1 - p) ** 2 * yk * logp)
    gxy = SCALE_XY * (gt[:, :2, :] - anchors[:, :2, :]) / anchors[:, 2:, :]
    gwh = SCALE_WH * jnp.log(gt[:, 2:, :] / anchors[:, 2:, :])
    gt_loc = jnp.concatenate([gxy, gwh], axis=1)
    pos = (gt_labels > 0)[:, None, :]
    d = jnp.abs(bbox_delta - gt_loc)
    sl1 = jnp.where(d < 1.0, 0.5 * d * d, d - 0.5)
    reg = jnp.sum(jnp.where(pos, sl1, 0.0))
    npos = jnp.sum(pos.astype(jnp.float32))
    return reg / npos + fc / npos, ce / npos, reg / npos


if __name__ == "__main__":
    B, C, NA = 2, NUM_CLASSES, 8732   # 8732 = real SSD anchor count (exercises padding+mask)
    key = jax.random.PRNGKey(0)
    k1, k2, k3, k4, k5, k6, k7 = jax.random.split(key, 7)

    # deterministic synthetic "anchors" parameter, shape [1, 4, NA] in xywh (f32)
    a_xy = jax.random.uniform(k1, (1, 2, NA), jnp.float32, 0.05, 0.95)
    a_wh = jax.random.uniform(k2, (1, 2, NA), jnp.float32, 0.10, 0.90)
    anchors = jnp.concatenate([a_xy, a_wh], axis=1)

    # activations / targets fed as bf16: halves HBM traffic for this mem-bound
    # kernel; the kernel still computes in f32.
    bbox_delta = jax.random.normal(k3, (B, 4, NA), jnp.float32).astype(jnp.bfloat16)
    confs = jax.random.normal(k4, (B, C, NA), jnp.float32).astype(jnp.bfloat16)
    g_xy = jax.random.uniform(k5, (B, NA, 2), jnp.float32, 0.05, 0.95)
    g_wh = jax.random.uniform(k6, (B, NA, 2), jnp.float32, 0.10, 0.90)
    gt_bbox = jnp.concatenate([g_xy, g_wh], axis=-1).astype(jnp.bfloat16)  # [B, NA, 4]
    gt_labels = jax.random.randint(k7, (B, NA), 0, C, jnp.int32)

    total_loss, to_log = ssd_focal_loss_box(bbox_delta, confs, gt_bbox, gt_labels, anchors)
    total_loss = jax.block_until_ready(total_loss)

    ref_total, ref_cls, ref_reg = _reference(bbox_delta, confs, gt_bbox, gt_labels, anchors)
    assert jnp.allclose(total_loss, ref_total, rtol=2e-3, atol=2e-3)
    assert jnp.allclose(to_log["classification_loss"], ref_cls, rtol=2e-3, atol=2e-3)
    assert jnp.allclose(to_log["regression_loss"], ref_reg, rtol=2e-3, atol=2e-3)

    print("KERNEL_OK")
</pallas_src>

<mosaic_0001>
module attributes {stable_mosaic.version = 11 : i64} {
  func.func @_ssd_focal_loss_kernel(%arg0: i32, %arg1: i32, %arg2: memref<1x4x1024xf32, #tpu.memory_space<vmem>>, %arg3: memref<2x4x1024xbf16, #tpu.memory_space<vmem>>, %arg4: memref<2x9x1024xbf16, #tpu.memory_space<vmem>>, %arg5: memref<2x4x1024xbf16, #tpu.memory_space<vmem>>, %arg6: memref<2x1024xi32, #tpu.memory_space<vmem>>, %arg7: memref<1x8x128xf32, #tpu.memory_space<vmem>>, %arg8: memref<2x1024xf32, #tpu.memory_space<vmem>>, %arg9: memref<2x1024xf32, #tpu.memory_space<vmem>>, %arg10: memref<2x2x1024xf32, #tpu.memory_space<vmem>>, %arg11: memref<2x1024xf32, #tpu.memory_space<vmem>>) attributes {dimension_semantics = [#tpu.dimension_semantics<parallel>, #tpu.dimension_semantics<arbitrary>], iteration_bounds = array<i64: 1, 9>, scalar_prefetch = 0 : i64, scratch_operands = 4 : i64, tpu.core_type = #tpu.core_type<tc>, window_params = [{transform_indices = @transform_0, window_bounds = array<i64: 1, 4, 1024>}, {transform_indices = @transform_1, window_bounds = array<i64: 2, 4, 1024>}, {transform_indices = @transform_2, window_bounds = array<i64: 2, 9, 1024>}, {transform_indices = @transform_3, window_bounds = array<i64: 2, 4, 1024>}, {transform_indices = @transform_4, window_bounds = array<i64: 2, 1024>}, {transform_indices = @transform_5, window_bounds = array<i64: 1, 8, 128>}]} {
    %c0_i32 = arith.constant 0 : i32
    %0 = arith.cmpi eq, %arg1, %c0_i32 : i32
    %1 = arith.extui %0 : i1 to i32
    %c0_i32_0 = arith.constant 0 : i32
    %2 = arith.cmpi ne, %1, %c0_i32_0 : i32
    scf.if %2 {
      %cst_53 = arith.constant 0.000000e+00 : f32
      %110 = vector.broadcast %cst_53 : f32 to vector<2x1024xf32>
      %c0_54 = arith.constant 0 : index
      %c0_55 = arith.constant 0 : index
      %111 = vector.load %arg8[%c0_54, %c0_55] : memref<2x1024xf32, #tpu.memory_space<vmem>>, vector<2x1024xf32>
      tpu.vector_store %arg8[%c0_54, %c0_55], %110 {strides = array<i32>} : memref<2x1024xf32, #tpu.memory_space<vmem>>, vector<2x1024xf32>,
      %cst_56 = arith.constant 0.000000e+00 : f32
      %112 = vector.broadcast %cst_56 : f32 to vector<2x1024xf32>
      %c0_57 = arith.constant 0 : index
      %c0_58 = arith.constant 0 : index
      %113 = vector.load %arg9[%c0_57, %c0_58] : memref<2x1024xf32, #tpu.memory_space<vmem>>, vector<2x1024xf32>
      tpu.vector_store %arg9[%c0_57, %c0_58], %112 {strides = array<i32>} : memref<2x1024xf32, #tpu.memory_space<vmem>>, vector<2x1024xf32>,
      %cst_59 = arith.constant 0.000000e+00 : f32
      %114 = vector.broadcast %cst_59 : f32 to vector<2x2x1024xf32>
      %c0_60 = arith.constant 0 : index
      %c0_61 = arith.constant 0 : index
      %c0_62 = arith.constant 0 : index
      %115 = vector.load %arg10[%c0_60, %c0_61, %c0_62] : memref<2x2x1024xf32, #tpu.memory_space<vmem>>, vector<2x2x1024xf32>
      tpu.vector_store %arg10[%c0_60, %c0_61, %c0_62], %114 {strides = array<i32>} : memref<2x2x1024xf32, #tpu.memory_space<vmem>>, vector<2x2x1024xf32>,
      %cst_63 = arith.constant 0.000000e+00 : f32
      %116 = vector.broadcast %cst_63 : f32 to vector<2x1024xf32>
      %c0_64 = arith.constant 0 : index
      %c0_65 = arith.constant 0 : index
      %117 = vector.load %arg11[%c0_64, %c0_65] : memref<2x1024xf32, #tpu.memory_space<vmem>>, vector<2x1024xf32>
      tpu.vector_store %arg11[%c0_64, %c0_65], %116 {strides = array<i32>} : memref<2x1024xf32, #tpu.memory_space<vmem>>, vector<2x1024xf32>,
    } else {
    }
    %c0 = arith.constant 0 : index
    %c0_1 = arith.constant 0 : index
    %c0_2 = arith.constant 0 : index
    %3 = vector.load %arg4[%c0, %c0_1, %c0_2] : memref<2x9x1024xbf16, #tpu.memory_space<vmem>>, vector<2x9x1024xbf16>
    %4 = arith.extf %3 : vector<2x9x1024xbf16> to vector<2x9x1024xf32>
    %c0_3 = arith.constant 0 : index
    %c0_4 = arith.constant 0 : index
    %5 = vector.load %arg6[%c0_3, %c0_4] : memref<2x1024xi32, #tpu.memory_space<vmem>>, vector<2x1024xi32>
    %cst = arith.constant dense<0xFF800000> : vector<2x1024xf32>
    %6 = vector.multi_reduction <maximumf>, %4, %cst [1] : vector<2x9x1024xf32> to vector<2x1024xf32>
    %7 = vector.shape_cast %6 : vector<2x1024xf32> to vector<2x1x1024xf32>
    %8 = vector.broadcast %7 : vector<2x1x1024xf32> to vector<2x9x1024xf32>
    %9 = arith.subf %4, %8 : vector<2x9x1024xf32>
    %10 = math.exp %9 : vector<2x9x1024xf32>
    %cst_5 = arith.constant dense<0.000000e+00> : vector<2x1024xf32>
    %11 = vector.multi_reduction <add>, %10, %cst_5 [1] : vector<2x9x1024xf32> to vector<2x1024xf32>
    %12 = math.log %11 : vector<2x1024xf32>
    %13 = tpu.iota {dimensions = array<i32: 1>} : vector<2x9x1024xi32>
    %14 = vector.shape_cast %5 : vector<2x1024xi32> to vector<2x1x1024xi32>
    %15 = vector.broadcast %14 : vector<2x1x1024xi32> to vector<2x9x1024xi32>
    %16 = arith.cmpi eq, %13, %15 : vector<2x9x1024xi32>
    %cst_6 = arith.constant 0.000000e+00 : f32
    %17 = vector.broadcast %cst_6 : f32 to vector<2x9x1024xf32>
    %18 = arith.select %16, %9, %17 : vector<2x9x1024xi1>, vector<2x9x1024xf32>
    %cst_7 = arith.constant dense<0.000000e+00> : vector<2x1024xf32>
    %19 = vector.multi_reduction <add>, %18, %cst_7 [1] : vector<2x9x1024xf32> to vector<2x1024xf32>
    %20 = arith.subf %19, %12 : vector<2x1024xf32>
    %21 = math.exp %20 : vector<2x1024xf32>
    %c9_i32 = arith.constant 9 : i32
    %22 = arith.muli %arg0, %c9_i32 : i32
    %23 = arith.addi %22, %arg1 : i32
    %c1024_i32 = arith.constant 1024 : i32
    %24 = arith.muli %23, %c1024_i32 : i32
    %25 = tpu.iota {dimensions = array<i32: 1>} : vector<2x1024xi32>
    %26 = vector.broadcast %24 : i32 to vector<2x1024xi32>
    %27 = arith.addi %26, %25 : vector<2x1024xi32>
    %c8732_i32 = arith.constant 8732 : i32
    %28 = vector.broadcast %c8732_i32 : i32 to vector<2x1024xi32>
    %29 = arith.cmpi slt, %27, %28 : vector<2x1024xi32>
    %cst_8 = arith.constant 0.000000e+00 : f32
    %30 = vector.broadcast %cst_8 : f32 to vector<2x1024xf32>
    %31 = arith.select %29, %20, %30 : vector<2x1024xi1>, vector<2x1024xf32>
    %c0_i32_9 = arith.constant 0 : i32
    %32 = vector.broadcast %c0_i32_9 : i32 to vector<2x1024xi32>
    %33 = arith.cmpi eq, %5, %32 : vector<2x1024xi32>
    %cst_10 = arith.constant 0.00999999977 : f32
    %cst_11 = arith.constant 1.000000e+00 : f32
    %34 = vector.broadcast %cst_10 : f32 to vector<2x1024xf32>
    %35 = vector.broadcast %cst_11 : f32 to vector<2x1024xf32>
    %36 = arith.select %33, %34, %35 : vector<2x1024xi1>, vector<2x1024xf32>
    %cst_12 = arith.constant 1.000000e+00 : f32
    %37 = vector.broadcast %cst_12 : f32 to vector<2x1024xf32>
    %38 = arith.subf %37, %21 : vector<2x1024xf32>
    %c0_13 = arith.constant 0 : index
    %c0_14 = arith.constant 0 : index
    %39 = vector.load %arg8[%c0_13, %c0_14] : memref<2x1024xf32, #tpu.memory_space<vmem>>, vector<2x1024xf32>
    %40 = arith.addf %39, %31 : vector<2x1024xf32>
    %c0_15 = arith.constant 0 : index
    %c0_16 = arith.constant 0 : index
    %41 = vector.load %arg8[%c0_15, %c0_16] : memref<2x1024xf32, #tpu.memory_space<vmem>>, vector<2x1024xf32>
    tpu.vector_store %arg8[%c0_15, %c0_16], %40 {strides = array<i32>} : memref<2x1024xf32, #tpu.memory_space<vmem>>, vector<2x1024xf32>,
    %c0_17 = arith.constant 0 : index
    %c0_18 = arith.constant 0 : index
    %42 = vector.load %arg9[%c0_17, %c0_18] : memref<2x1024xf32, #tpu.memory_space<vmem>>, vector<2x1024xf32>
    %43 = arith.mulf %38, %38 : vector<2x1024xf32>
    %44 = arith.mulf %36, %43 : vector<2x1024xf32>
    %45 = arith.mulf %44, %31 : vector<2x1024xf32>
    %46 = arith.addf %42, %45 : vector<2x1024xf32>
    %c0_19 = arith.constant 0 : index
    %c0_20 = arith.constant 0 : index
    %47 = vector.load %arg9[%c0_19, %c0_20] : memref<2x1024xf32, #tpu.memory_space<vmem>>, vector<2x1024xf32>
    tpu.vector_store %arg9[%c0_19, %c0_20], %46 {strides = array<i32>} : memref<2x1024xf32, #tpu.memory_space<vmem>>, vector<2x1024xf32>,
    %c0_21 = arith.constant 0 : index
    %c0_22 = arith.constant 0 : index
    %c0_23 = arith.constant 0 : index
    %48 = vector.load %arg2[%c0_21, %c0_22, %c0_23] : memref<1x4x1024xf32, #tpu.memory_space<vmem>>, vector<1x4x1024xf32>
    %49 = vector.extract_strided_slice %48 {offsets = [0, 0, 0], sizes = [1, 2, 1024], strides = [1, 1, 1]} : vector<1x4x1024xf32> to vector<1x2x1024xf32>
    %50 = vector.extract_strided_slice %48 {offsets = [0, 2, 0], sizes = [1, 2, 1024], strides = [1, 1, 1]} : vector<1x4x1024xf32> to vector<1x2x1024xf32>
    %c0_24 = arith.constant 0 : index
    %c0_25 = arith.constant 0 : index
    %c0_26 = arith.constant 0 : index
    %51 = vector.load %arg5[%c0_24, %c0_25, %c0_26] : memref<2x4x1024xbf16, #tpu.memory_space<vmem>>, vector<2x4x1024xbf16>
    %52 = arith.extf %51 : vector<2x4x1024xbf16> to vector<2x4x1024xf32>
    %53 = vector.extract_strided_slice %52 {offsets = [0, 0, 0], sizes = [2, 2, 1024], strides = [1, 1, 1]} : vector<2x4x1024xf32> to vector<2x2x1024xf32>
    %54 = vector.broadcast %49 : vector<1x2x1024xf32> to vector<2x2x1024xf32>
    %55 = arith.subf %53, %54 : vector<2x2x1024xf32>
    %cst_27 = arith.constant 1.000000e+01 : f32
    %56 = vector.broadcast %cst_27 : f32 to vector<2x2x1024xf32>
    %57 = arith.mulf %56, %55 : vector<2x2x1024xf32>
    %58 = vector.broadcast %50 : vector<1x2x1024xf32> to vector<2x2x1024xf32>
    %59 = arith.mulf %57, %58 : vector<2x2x1024xf32>
    %60 = vector.extract_strided_slice %52 {offsets = [0, 2, 0], sizes = [2, 2, 1024], strides = [1, 1, 1]} : vector<2x4x1024xf32> to vector<2x2x1024xf32>
    %61 = vector.broadcast %50 : vector<1x2x1024xf32> to vector<2x2x1024xf32>
    %62 = arith.mulf %60, %61 : vector<2x2x1024xf32>
    %63 = math.log %62 : vector<2x2x1024xf32>
    %cst_28 = arith.constant 5.000000e+00 : f32
    %64 = vector.broadcast %cst_28 : f32 to vector<2x2x1024xf32>
    %65 = arith.mulf %64, %63 : vector<2x2x1024xf32>
    %c0_29 = arith.constant 0 : index
    %c0_30 = arith.constant 0 : index
    %c0_31 = arith.constant 0 : index
    %66 = vector.load %arg3[%c0_29, %c0_30, %c0_31] : memref<2x4x1024xbf16, #tpu.memory_space<vmem>>, vector<2x4x1024xbf16>
    %67 = arith.extf %66 : vector<2x4x1024xbf16> to vector<2x4x1024xf32>
    %c0_i32_32 = arith.constant 0 : i32
    %68 = vector.broadcast %c0_i32_32 : i32 to vector<2x1024xi32>
    %69 = arith.cmpi sgt, %5, %68 : vector<2x1024xi32>
    %c0_33 = arith.constant 0 : index
    %c0_34 = arith.constant 0 : index
    %c0_35 = arith.constant 0 : index
    %70 = vector.load %arg10[%c0_33, %c0_34, %c0_35] : memref<2x2x1024xf32, #tpu.memory_space<vmem>>, vector<2x2x1024xf32>
    %71 = vector.shape_cast %69 : vector<2x1024xi1> to vector<2x1x1024xi1>
    %72 = vector.extract_strided_slice %67 {offsets = [0, 0, 0], sizes = [2, 2, 1024], strides = [1, 1, 1]} : vector<2x4x1024xf32> to vector<2x2x1024xf32>
    %73 = arith.subf %72, %59 : vector<2x2x1024xf32>
    %74 = math.absf %73 : vector<2x2x1024xf32>
    %cst_36 = arith.constant 1.000000e+00 : f32
    %75 = vector.broadcast %cst_36 : f32 to vector<2x2x1024xf32>
    %76 = arith.cmpf olt, %74, %75 : vector<2x2x1024xf32>
    %cst_37 = arith.constant 5.000000e-01 : f32
    %77 = vector.broadcast %cst_37 : f32 to vector<2x2x1024xf32>
    %78 = arith.mulf %77, %74 : vector<2x2x1024xf32>
    %79 = arith.mulf %78, %74 : vector<2x2x1024xf32>
    %cst_38 = arith.constant 5.000000e-01 : f32
    %80 = vector.broadcast %cst_38 : f32 to vector<2x2x1024xf32>
    %81 = arith.subf %74, %80 : vector<2x2x1024xf32>
    %82 = arith.select %76, %79, %81 : vector<2x2x1024xi1>, vector<2x2x1024xf32>
    %83 = vector.extract_strided_slice %67 {offsets = [0, 2, 0], sizes = [2, 2, 1024], strides = [1, 1, 1]} : vector<2x4x1024xf32> to vector<2x2x1024xf32>
    %84 = arith.subf %83, %65 : vector<2x2x1024xf32>
    %85 = math.absf %84 : vector<2x2x1024xf32>
    %cst_39 = arith.constant 1.000000e+00 : f32
    %86 = vector.broadcast %cst_39 : f32 to vector<2x2x1024xf32>
    %87 = arith.cmpf olt, %85, %86 : vector<2x2x1024xf32>
    %cst_40 = arith.constant 5.000000e-01 : f32
    %88 = vector.broadcast %cst_40 : f32 to vector<2x2x1024xf32>
    %89 = arith.mulf %88, %85 : vector<2x2x1024xf32>
    %90 = arith.mulf %89, %85 : vector<2x2x1024xf32>
    %cst_41 = arith.constant 5.000000e-01 : f32
    %91 = vector.broadcast %cst_41 : f32 to vector<2x2x1024xf32>
    %92 = arith.subf %85, %91 : vector<2x2x1024xf32>
    %93 = arith.select %87, %90, %92 : vector<2x2x1024xi1>, vector<2x2x1024xf32>
    %94 = arith.addf %82, %93 : vector<2x2x1024xf32>
    %cst_42 = arith.constant 0.000000e+00 : f32
    %95 = vector.shape_cast %71 : vector<2x1x1024xi1> to vector<2x1x1024xi1>
    %96 = vector.broadcast %95 : vector<2x1x1024xi1> to vector<2x2x1024xi1>
    %97 = vector.broadcast %cst_42 : f32 to vector<2x2x1024xf32>
    %98 = arith.select %96, %94, %97 : vector<2x2x1024xi1>, vector<2x2x1024xf32>
    %99 = arith.addf %70, %98 : vector<2x2x1024xf32>
    %c0_43 = arith.constant 0 : index
    %c0_44 = arith.constant 0 : index
    %c0_45 = arith.constant 0 : index
    %100 = vector.load %arg10[%c0_43, %c0_44, %c0_45] : memref<2x2x1024xf32, #tpu.memory_space<vmem>>, vector<2x2x1024xf32>
    tpu.vector_store %arg10[%c0_43, %c0_44, %c0_45], %99 {strides = array<i32>} : memref<2x2x1024xf32, #tpu.memory_space<vmem>>, vector<2x2x1024xf32>,
    %c0_46 = arith.constant 0 : index
    %c0_47 = arith.constant 0 : index
    %101 = vector.load %arg11[%c0_46, %c0_47] : memref<2x1024xf32, #tpu.memory_space<vmem>>, vector<2x1024xf32>
    %cst_48 = arith.constant 1.000000e+00 : f32
    %cst_49 = arith.constant 0.000000e+00 : f32
    %102 = vector.broadcast %cst_48 : f32 to vector<2x1024xf32>
    %103 = vector.broadcast %cst_49 : f32 to vector<2x1024xf32>
    %104 = arith.select %69, %102, %103 : vector<2x1024xi1>, vector<2x1024xf32>
    %105 = arith.addf %101, %104 : vector<2x1024xf32>
    %c0_50 = arith.constant 0 : index
    %c0_51 = arith.constant 0 : index
    %106 = vector.load %arg11[%c0_50, %c0_51] : memref<2x1024xf32, #tpu.memory_space<vmem>>, vector<2x1024xf32>
    tpu.vector_store %arg11[%c0_50, %c0_51], %105 {strides = array<i32>} : memref<2x1024xf32, #tpu.memory_space<vmem>>, vector<2x1024xf32>,
    %c8_i32 = arith.constant 8 : i32
    %107 = arith.cmpi eq, %arg1, %c8_i32 : i32
    %108 = arith.extui %107 : i1 to i32
    %c0_i32_52 = arith.constant 0 : i32
    %109 = arith.cmpi ne, %108, %c0_i32_52 : i32
    scf.if %109 {
      %c0_53 = arith.constant 0 : index
      %c0_54 = arith.constant 0 : index
      %110 = vector.load %arg8[%c0_53, %c0_54] : memref<2x1024xf32, #tpu.memory_space<vmem>>, vector<2x1024xf32>
      %111 = vector.shape_cast %110 : vector<2x1024xf32> to vector<1x2x1024xf32>
      %cst_55 = arith.constant dense<0.000000e+00> : vector<1xf32>
      %112 = vector.multi_reduction <add>, %111, %cst_55 [1, 2] : vector<1x2x1024xf32> to vector<1xf32>
      %113 = vector.shape_cast %112 : vector<1xf32> to vector<1x1x1xf32>
      %114 = vector.extract %113[0, 0, 0] : f32 from vector<1x1x1xf32>
      %cst_56 = arith.constant 0.000000e+00 : f32
      %115 = arith.subf %cst_56, %114 : f32
      %c0_57 = arith.constant 0 : index
      %c0_58 = arith.constant 0 : index
      %116 = vector.load %arg9[%c0_57, %c0_58] : memref<2x1024xf32, #tpu.memory_space<vmem>>, vector<2x1024xf32>
      %117 = vector.shape_cast %116 : vector<2x1024xf32> to vector<1x2x1024xf32>
      %cst_59 = arith.constant dense<0.000000e+00> : vector<1xf32>
      %118 = vector.multi_reduction <add>, %117, %cst_59 [1, 2] : vector<1x2x1024xf32> to vector<1xf32>
      %119 = vector.shape_cast %118 : vector<1xf32> to vector<1x1x1xf32>
      %120 = vector.extract %119[0, 0, 0] : f32 from vector<1x1x1xf32>
      %cst_60 = arith.constant 0.000000e+00 : f32
      %121 = arith.subf %cst_60, %120 : f32
      %c0_61 = arith.constant 0 : index
      %c0_62 = arith.constant 0 : index
      %c0_63 = arith.constant 0 : index
      %122 = vector.load %arg10[%c0_61, %c0_62, %c0_63] : memref<2x2x1024xf32, #tpu.memory_space<vmem>>, vector<2x2x1024xf32>
      %123 = vector.shape_cast %122 : vector<2x2x1024xf32> to vector<1x2x2x1024xf32>
      %cst_64 = arith.constant dense<0.000000e+00> : vector<1xf32>
      %124 = vector.multi_reduction <add>, %123, %cst_64 [1, 2, 3] : vector<1x2x2x1024xf32> to vector<1xf32>
      %125 = vector.shape_cast %124 : vector<1xf32> to vector<1x1x1x1xf32>
      %126 = vector.extract %125[0, 0, 0, 0] : f32 from vector<1x1x1x1xf32>
      %c0_65 = arith.constant 0 : index
      %c0_66 = arith.constant 0 : index
      %127 = vector.load %arg11[%c0_65, %c0_66] : memref<2x1024xf32, #tpu.memory_space<vmem>>, vector<2x1024xf32>
      %128 = vector.shape_cast %127 : vector<2x1024xf32> to vector<1x2x1024xf32>
      %cst_67 = arith.constant dense<0.000000e+00> : vector<1xf32>
      %129 = vector.multi_reduction <add>, %128, %cst_67 [1, 2] : vector<1x2x1024xf32> to vector<1xf32>
      %130 = vector.shape_cast %129 : vector<1xf32> to vector<1x1x1xf32>
      %131 = vector.extract %130[0, 0, 0] : f32 from vector<1x1x1xf32>
      %132 = tpu.iota {dimensions = array<i32: 2>} : vector<1x8x128xi32>
      %c0_i32_68 = arith.constant 0 : i32
      %133 = vector.broadcast %c0_i32_68 : i32 to vector<1x8x128xi32>
      %134 = arith.cmpi eq, %132, %133 : vector<1x8x128xi32>
      %c1_i32 = arith.constant 1 : i32
      %135 = vector.broadcast %c1_i32 : i32 to vector<1x8x128xi32>
      %136 = arith.cmpi eq, %132, %135 : vector<1x8x128xi32>
      %c2_i32 = arith.constant 2 : i32
      %137 = vector.broadcast %c2_i32 : i32 to vector<1x8x128xi32>
      %138 = arith.cmpi eq, %132, %137 : vector<1x8x128xi32>
      %c3_i32 = arith.constant 3 : i32
      %139 = vector.broadcast %c3_i32 : i32 to vector<1x8x128xi32>
      %140 = arith.cmpi eq, %132, %139 : vector<1x8x128xi32>
      %cst_69 = arith.constant 0.000000e+00 : f32
      %141 = vector.broadcast %131 : f32 to vector<1x8x128xf32>
      %142 = vector.broadcast %cst_69 : f32 to vector<1x8x128xf32>
      %143 = arith.select %140, %141, %142 : vector<1x8x128xi1>, vector<1x8x128xf32>
      %144 = vector.broadcast %126 : f32 to vector<1x8x128xf32>
      %145 = arith.select %138, %144, %143 : vector<1x8x128xi1>, vector<1x8x128xf32>
      %146 = vector.broadcast %121 : f32 to vector<1x8x128xf32>
      %147 = arith.select %136, %146, %145 : vector<1x8x128xi1>, vector<1x8x128xf32>
      %148 = vector.broadcast %115 : f32 to vector<1x8x128xf32>
      %149 = arith.select %134, %148, %147 : vector<1x8x128xi1>, vector<1x8x128xf32>
      %c0_70 = arith.constant 0 : index
      %c0_71 = arith.constant 0 : index
      %c0_72 = arith.constant 0 : index
      %150 = vector.load %arg7[%c0_70, %c0_71, %c0_72] : memref<1x8x128xf32, #tpu.memory_space<vmem>>, vector<1x8x128xf32>
      tpu.vector_store %arg7[%c0_70, %c0_71, %c0_72], %149 {strides = array<i32>} : memref<1x8x128xf32, #tpu.memory_space<vmem>>, vector<1x8x128xf32>,
    } else {
    }
    return
  }
  func.func @transform_0(%arg0: i32, %arg1: i32) -> (i32, i32, i32) {
    %c9_i32 = arith.constant 9 : i32
    %0 = arith.muli %arg0, %c9_i32 : i32
    %1 = arith.addi %0, %arg1 : i32
    %c0_i32 = arith.constant 0 : i32
    %c0_i32_0 = arith.constant 0 : i32
    %c0_i32_1 = arith.constant 0 : i32
    return %c0_i32, %c0_i32_0, %1 : i32, i32, i32
  }
  func.func @transform_1(%arg0: i32, %arg1: i32) -> (i32, i32, i32) {
    %c9_i32 = arith.constant 9 : i32
    %0 = arith.muli %arg0, %c9_i32 : i32
    %1 = arith.addi %0, %arg1 : i32
    %c0_i32 = arith.constant 0 : i32
    %c0_i32_0 = arith.constant 0 : i32
    %c0_i32_1 = arith.constant 0 : i32
    return %c0_i32, %c0_i32_0, %1 : i32, i32, i32
  }
  func.func @transform_2(%arg0: i32, %arg1: i32) -> (i32, i32, i32) {
    %c9_i32 = arith.constant 9 : i32
    %0 = arith.muli %arg0, %c9_i32 : i32
    %1 = arith.addi %0, %arg1 : i32
    %c0_i32 = arith.constant 0 : i32
    %c0_i32_0 = arith.constant 0 : i32
    %c0_i32_1 = arith.constant 0 : i32
    return %c0_i32, %c0_i32_0, %1 : i32, i32, i32
  }
  func.func @transform_3(%arg0: i32, %arg1: i32) -> (i32, i32, i32) {
    %c9_i32 = arith.constant 9 : i32
    %0 = arith.muli %arg0, %c9_i32 : i32
    %1 = arith.addi %0, %arg1 : i32
    %c0_i32 = arith.constant 0 : i32
    %c0_i32_0 = arith.constant 0 : i32
    %c0_i32_1 = arith.constant 0 : i32
    return %c0_i32, %c0_i32_0, %1 : i32, i32, i32
  }
  func.func @transform_4(%arg0: i32, %arg1: i32) -> (i32, i32) {
    %c9_i32 = arith.constant 9 : i32
    %0 = arith.muli %arg0, %c9_i32 : i32
    %1 = arith.addi %0, %arg1 : i32
    %c0_i32 = arith.constant 0 : i32
    %c0_i32_0 = arith.constant 0 : i32
    return %c0_i32, %1 : i32, i32
  }
  func.func @transform_5(%arg0: i32, %arg1: i32) -> (i32, i32, i32) {
    %c0_i32 = arith.constant 0 : i32
    %c0_i32_0 = arith.constant 0 : i32
    %c0_i32_1 = arith.constant 0 : i32
    return %arg0, %c0_i32, %c0_i32_0 : i32, i32, i32
  }
}

</mosaic_0001>

<llo_original>
// kernel: tpu_custom_call.1
$region0: #{tpu_custom_call.1}
  #allocation0 [shape = 'u32[]', space=smem, size = 0x4, offset = 0x4, fixed_abs, tag = 'smem constant byte address 0x4 - core index']
  #allocation1 [shape = 'u32[72,128]{1,0:T(1,128)}', space=vmem, size = 0x9000, scoped, tag = 'internal scratch']
  #allocation2 [shape = 'f32[2,1024]{1,0:T(2,128)}', space=vmem, size = 0x2000, scoped, tag = 'scratch operand']
  #allocation3 [shape = 'f32[2,1024]{1,0:T(2,128)}', space=vmem, size = 0x2000, scoped, tag = 'scratch operand']
  #allocation4 [shape = 'f32[2,2,1024]{2,1,0:T(2,128)}', space=vmem, size = 0x4000, scoped, tag = 'scratch operand']
  #allocation5 [shape = 'f32[2,1024]{1,0:T(2,128)}', space=vmem, size = 0x2000, scoped, tag = 'scratch operand']
  %s0 = inlined_call_operand.vmem [shape: f32[1,4,9216], index: 0, kind: input, shape index: {}]
  %s1 = inlined_call_operand.vmem [shape: bf16[2,4,9216], index: 1, kind: input, shape index: {}]
  %s2 = inlined_call_operand.vmem [shape: bf16[2,9,9216], index: 2, kind: input, shape index: {}]
  %s3 = inlined_call_operand.vmem [shape: bf16[2,4,9216], index: 3, kind: input, shape index: {}]
  %s4 = inlined_call_operand.vmem [shape: s32[2,9216], index: 4, kind: input, shape index: {}]
  %s5 = inlined_call_operand.hbm [shape: f32[1,8,128], index: 5, kind: output, shape index: {}]
  %s6 = sld [smem:[#allocation0]]
  $region130: #{tpu_custom_call.1} parent=0
    _
  %s8 = ssub.s32 1, %s6
  %s9 = scalar_select 0, %s8, %s6
  $region1: #{tpu_custom_call.1} parent=0
    #allocation6 [shape = 'u8[32768]{0}', space=vmem, size = 0x8000, scoped, tag = 'input window, operand 1']
    #allocation7 [shape = 'u8[131072]{0}', space=vmem, size = 0x20000, scoped, tag = 'input window, operand 2']
    #allocation8 [shape = 'u8[32768]{0}', space=vmem, size = 0x8000, scoped, tag = 'input window, operand 3']
    #allocation9 [shape = 'u8[4096]{0}', space=vmem, size = 0x1000, scoped, tag = 'output window, operand 0, single buffered']
    #allocation10 [shape = 's32[2]{0}', space=sflag, size = 0x8, scoped, tag = 'scoped memory for tpu_custom_call.1']
    %10 = vsyncpa [#allocation10], 0
    loop: start=0, step=1, limit=11
    $region2: #{tpu_custom_call.1} parent=1 // loop_pre_header
      _
    $region3: #{tpu_custom_call.1} parent=1 // loop_header
      %s12 = sphi 0, %s16
      %p13 = scmp.ge.s32.totalorder %s12, 11
      %s19 = sphi 0, %s31
      %s20 = sphi 0, %s27
      %s21 = sphi 0, %s19
      %s22 = sphi 0, %s20
      %s23 = sphi 0, %s21
      %s24 = sphi 0, %s22
      %s38 = sphi 0, %s40
      %s41 = sphi 0, %s38
      %s42 = sphi 0, %s41
      %s58 = sphi 0, %s42
      %s68 = sphi 0, %s70
      %s71 = sphi 0, %s68
      %s72 = sphi 0, %s71
      %s88 = sphi 0, %s72
      %s98 = sphi 0, %s100
      %s101 = sphi 0, %s98
      %s102 = sphi 0, %s101
      %s118 = sphi 0, %s102
      %s128 = sphi 0, %s130
      %s131 = sphi 0, %s128
      %s132 = sphi 0, %s131
      %s148 = sphi 0, %s132
      %s158 = sphi 0, %s160
      %s161 = sphi 0, %s158
      %s162 = sphi 0, %s161
      %s178 = sphi 0, %s162
      %s184 = sphi 0, %s186
      %s187 = sphi 0, %s184
      %s188 = sphi 0, %s187
      %s204 = sphi 0, %s188
    $region4: #{tpu_custom_call.1} parent=1 // loop_header_branch
      %15 = sbr.rel (%p13) target = $region8
    $region5: #{tpu_custom_call.1} parent=1 // loop_body
      %s17 = ssub.s32 %s12, 1
      %s18 = ssub.s32 %s12, 2
      %s25 = sadd.s32 1, %s20
      %p26 = scmp.ge.s32.totalorder %s25, 9
      %s27 = scalar_select %p26, 0, %s25
      %s28 = sadd.s32 1, %s19
      %s29 = scalar_select %p26, %s28, %s19
      %p30 = scmp.ge.s32.totalorder %s29, 1
      %s31 = scalar_select %p30, 0, %s29
      %s32 = smul.u32 %s19, 9
      %s33 = sadd.s32 %s32, %s20
      %s34 = smul.u32 %s31, 9
      %s35 = sadd.s32 %s34, %s27
      %s36 = ssub.s32 %s33, %s35
      %p37 = scmp.eq.s32.totalorder %s36, 0
      %s39 = sadd.s32 %s38, 1
      %s40 = scalar_select %p37, %s38, %s39
      %p43 = pneg %p37
      %p44 = scmp.eq.s32.totalorder %s12, 8
      %p45 = por %p43, %p44
      %p46 = scmp.ne.s32.totalorder %s38, %s41
      %p47 = scmp.eq.s32.totalorder %s12, 0
      %p48 = por %p46, %p47
      %p49 = scmp.ne.s32.totalorder %s38, %s41
      %p50 = scmp.eq.s32.totalorder %s17, 8
      %p51 = por %p49, %p50
      %p52 = scmp.ne.s32.totalorder %s41, %s42
      %p53 = scmp.eq.s32.totalorder %s17, 0
      %p54 = por %p52, %p53
      %p55 = scmp.ne.s32.totalorder %s41, %s42
      %p56 = scmp.eq.s32.totalorder %s18, 8
      %p57 = por %p55, %p56
      %p59 = scmp.ne.s32.totalorder %s42, %s58
      %p60 = scmp.eq.s32.totalorder %s18, 0
      %p61 = por %p59, %p60
      %s62 = smul.u32 %s19, 9
      %s63 = sadd.s32 %s62, %s20
      %s64 = smul.u32 %s31, 9
      %s65 = sadd.s32 %s64, %s27
      %s66 = ssub.s32 %s63, %s65
      %p67 = scmp.eq.s32.totalorder %s66, 0
      %s69 = sadd.s32 %s68, 1
      %s70 = scalar_select %p67, %s68, %s69
      %p73 = pneg %p67
      %p74 = scmp.eq.s32.totalorder %s12, 8
      %p75 = por %p73, %p74
      %p76 = scmp.ne.s32.totalorder %s68, %s71
      %p77 = scmp.eq.s32.totalorder %s12, 0
      %p78 = por %p76, %p77
      %p79 = scmp.ne.s32.totalorder %s68, %s71
      %p80 = scmp.eq.s32.totalorder %s17, 8
      %p81 = por %p79, %p80
      %p82 = scmp.ne.s32.totalorder %s71, %s72
      %p83 = scmp.eq.s32.totalorder %s17, 0
      %p84 = por %p82, %p83
      %p85 = scmp.ne.s32.totalorder %s71, %s72
      %p86 = scmp.eq.s32.totalorder %s18, 8
      %p87 = por %p85, %p86
      %p89 = scmp.ne.s32.totalorder %s72, %s88
      %p90 = scmp.eq.s32.totalorder %s18, 0
      %p91 = por %p89, %p90
      %s92 = smul.u32 %s19, 9
      %s93 = sadd.s32 %s92, %s20
      %s94 = smul.u32 %s31, 9
      %s95 = sadd.s32 %s94, %s27
      %s96 = ssub.s32 %s93, %s95
      %p97 = scmp.eq.s32.totalorder %s96, 0
      %s99 = sadd.s32 %s98, 1
      %s100 = scalar_select %p97, %s98, %s99
      %p103 = pneg %p97
      %p104 = scmp.eq.s32.totalorder %s12, 8
      %p105 = por %p103, %p104
      %p106 = scmp.ne.s32.totalorder %s98, %s101
      %p107 = scmp.eq.s32.totalorder %s12, 0
      %p108 = por %p106, %p107
      %p109 = scmp.ne.s32.totalorder %s98, %s101
      %p110 = scmp.eq.s32.totalorder %s17, 8
      %p111 = por %p109, %p110
      %p112 = scmp.ne.s32.totalorder %s101, %s102
      %p113 = scmp.eq.s32.totalorder %s17, 0
      %p114 = por %p112, %p113
      %p115 = scmp.ne.s32.totalorder %s101, %s102
      %p116 = scmp.eq.s32.totalorder %s18, 8
      %p117 = por %p115, %p116
      %p119 = scmp.ne.s32.totalorder %s102, %s118
      %p120 = scmp.eq.s32.totalorder %s18, 0
      %p121 = por %p119, %p120
      %s122 = smul.u32 %s19, 9
      %s123 = sadd.s32 %s122, %s20
      %s124 = smul.u32 %s31, 9
      %s125 = sadd.s32 %s124, %s27
      %s126 = ssub.s32 %s123, %s125
      %p127 = scmp.eq.s32.totalorder %s126, 0
      %s129 = sadd.s32 %s128, 1
      %s130 = scalar_select %p127, %s128, %s129
      %p133 = pneg %p127
      %p134 = scmp.eq.s32.totalorder %s12, 8
      %p135 = por %p133, %p134
      %p136 = scmp.ne.s32.totalorder %s128, %s131
      %p137 = scmp.eq.s32.totalorder %s12, 0
      %p138 = por %p136, %p137
      %p139 = scmp.ne.s32.totalorder %s128, %s131
      %p140 = scmp.eq.s32.totalorder %s17, 8
      %p141 = por %p139, %p140
      %p142 = scmp.ne.s32.totalorder %s131, %s132
      %p143 = scmp.eq.s32.totalorder %s17, 0
      %p144 = por %p142, %p143
      %p145 = scmp.ne.s32.totalorder %s131, %s132
      %p146 = scmp.eq.s32.totalorder %s18, 8
      %p147 = por %p145, %p146
      %p149 = scmp.ne.s32.totalorder %s132, %s148
      %p150 = scmp.eq.s32.totalorder %s18, 0
      %p151 = por %p149, %p150
      %s152 = smul.u32 %s19, 9
      %s153 = sadd.s32 %s152, %s20
      %s154 = smul.u32 %s31, 9
      %s155 = sadd.s32 %s154, %s27
      %s156 = ssub.s32 %s153, %s155
      %p157 = scmp.eq.s32.totalorder %s156, 0
      %s159 = sadd.s32 %s158, 1
      %s160 = scalar_select %p157, %s158, %s159
      %p163 = pneg %p157
      %p164 = scmp.eq.s32.totalorder %s12, 8
      %p165 = por %p163, %p164
      %p166 = scmp.ne.s32.totalorder %s158, %s161
      %p167 = scmp.eq.s32.totalorder %s12, 0
      %p168 = por %p166, %p167
      %p169 = scmp.ne.s32.totalorder %s158, %s161
      %p170 = scmp.eq.s32.totalorder %s17, 8
      %p171 = por %p169, %p170
      %p172 = scmp.ne.s32.totalorder %s161, %s162
      %p173 = scmp.eq.s32.totalorder %s17, 0
      %p174 = por %p172, %p173
      %p175 = scmp.ne.s32.totalorder %s161, %s162
      %p176 = scmp.eq.s32.totalorder %s18, 8
      %p177 = por %p175, %p176
      %p179 = scmp.ne.s32.totalorder %s162, %s178
      %p180 = scmp.eq.s32.totalorder %s18, 0
      %p181 = por %p179, %p180
      %s182 = ssub.s32 %s19, %s31
      %p183 = scmp.eq.s32.totalorder %s182, 0
      %s185 = sadd.s32 %s184, 1
      %s186 = scalar_select %p183, %s184, %s185
      %p189 = pneg %p183
      %p190 = scmp.eq.s32.totalorder %s12, 8
      %p191 = por %p189, %p190
      %p192 = scmp.ne.s32.totalorder %s184, %s187
      %p193 = scmp.eq.s32.totalorder %s12, 0
      %p194 = por %p192, %p193
      %p195 = scmp.ne.s32.totalorder %s184, %s187
      %p196 = scmp.eq.s32.totalorder %s17, 8
      %p197 = por %p195, %p196
      %p198 = scmp.ne.s32.totalorder %s187, %s188
      %p199 = scmp.eq.s32.totalorder %s17, 0
      %p200 = por %p198, %p199
      %p201 = scmp.ne.s32.totalorder %s187, %s188
      %p202 = scmp.eq.s32.totalorder %s18, 8
      %p203 = por %p201, %p202
      %p205 = scmp.ne.s32.totalorder %s188, %s204
      %p206 = scmp.eq.s32.totalorder %s18, 0
      %p207 = por %p205, %p206
      %p208 = scmp.le.s32.totalorder 1, %s12
      %p209 = scmp.lt.s32.totalorder %s12, 10
      %p210 = pnand %p208, %p209
      %p211 = pneg %p210
      // Predicated region
      $region9: #{tpu_custom_call.1} parent=5 // pred_check
        _
      $region10: #{tpu_custom_call.1} parent=5 // pred_check_branch
        %213 = sbr.rel (%p210) target = $region12
      $region11: #{tpu_custom_call.1} parent=5 // pred_region
        %s214 = ssub.s32 %s12, 1
      $region12: #{tpu_custom_call.1} parent=5 // pred_fallthru
        _
      %p215 = scmp.lt.s32.totalorder %s12, 9
      // Predicated region
      $region13: #{tpu_custom_call.1} parent=5 // pred_check
        %p216 = pneg %p215
      $region14: #{tpu_custom_call.1} parent=5 // pred_check_branch
        %218 = sbr.rel (%p216) target = $region16
      $region15: #{tpu_custom_call.1} parent=5 // pred_region
        // Predicated region
        $region17: #{tpu_custom_call.1} parent=15 // pred_check
          %p219 = pneg %p48
        $region18: #{tpu_custom_call.1} parent=15 // pred_check_branch
          %221 = sbr.rel (%p219) target = $region20
        $region19: #{tpu_custom_call.1} parent=15 // pred_region
          %s222 = smul.u32 %s19, 9
          %s223 = sadd.s32 %s222, %s20
          %s224 = smul.u32 8, %s223
          %p225 = scmp.lt.s32.totalorder %s224, 71
          %s226 = scalar_select %p225, %s224, 71
          %s227 = smul.addr %s226, 4
          %s228 = scalar_lea.vmem %s0, %s227
          %s229 = smul.u32 %s19, 9
          %s230 = sadd.s32 %s229, %s20
          %s231 = smul.u32 8, %s230
        $region20: #{tpu_custom_call.1} parent=15 // pred_fallthru
          _
        // Predicated region
        $region21: #{tpu_custom_call.1} parent=15 // pred_check
          %p232 = pneg %p78
        $region22: #{tpu_custom_call.1} parent=15 // pred_check_branch
          %234 = sbr.rel (%p232) target = $region24
        $region23: #{tpu_custom_call.1} parent=15 // pred_region
          %s235 = sand.u32 %s68, 1
          %s236 = sand.u32 %s68, 1
          %s237 = smul.addr %s236, 32
          %s238 = scalar_lea.vmem [#allocation6], %s237
          %s239 = smul.u32 %s19, 9
          %s240 = sadd.s32 %s239, %s20
          %s241 = smul.u32 8, %s240
          %s242 = smul.addr %s241, 2
          %s243 = scalar_lea.vmem %s1, %s242
          // Predicated region
          $region25: #{tpu_custom_call.1} parent=23 // pred_check
            _
          $region26: #{tpu_custom_call.1} parent=23 // pred_check_branch
            %245 = sbr.rel (0) target = $region28
          $region27: #{tpu_custom_call.1} parent=23 // pred_region
            // Predicated region
            $region29: #{tpu_custom_call.1} parent=27 // pred_check
              _
            $region30: #{tpu_custom_call.1} parent=27 // pred_check_branch
              %247 = sbr.rel (0) target = $region32
            $region31: #{tpu_custom_call.1} parent=27 // pred_region
              loop: start=0, step=1, limit=1
              $region33: #{tpu_custom_call.1} parent=31 // loop_pre_header
                _
              $region34: #{tpu_custom_call.1} parent=31 // loop_header
                %s249 = sphi 0, %s253
                %p250 = scmp.ge.s32.totalorder %s249, 1
                %s254 = sphi %s243, %s243
                %s255 = sphi %s238, %s238
              $region35: #{tpu_custom_call.1} parent=31 // loop_header_branch
                %252 = sbr.rel (%p250) target = $region39
              $region36: #{tpu_custom_call.1} parent=31 // loop_body
                %v256 = vld [vmem:[%s254] sm:$0xff]
                %257 = vst [vmem:[%s255] sm:$0xff] %v256
                %v258 = vld [vmem:[%s254 + $0x8] sm:$0xff]
                %259 = vst [vmem:[%s255 + $0x8] sm:$0xff] %v258
                %v260 = vld [vmem:[%s254 + $0x90] sm:$0xff]
                %261 = vst [vmem:[%s255 + $0x10] sm:$0xff] %v260
                %v262 = vld [vmem:[%s254 + $0x98] sm:$0xff]
                %263 = vst [vmem:[%s255 + $0x18] sm:$0xff] %v262
              $region37: #{tpu_custom_call.1} parent=31 // loop_footer
                %s253 = sadd.s32 1, %s249
              $region38: #{tpu_custom_call.1} parent=31 // loop_footer_branch
                %248 = sbr.rel target = $region34
              $region39: #{tpu_custom_call.1} parent=31 // loop_exit
                _
            $region32: #{tpu_custom_call.1} parent=27 // pred_fallthru
              _
            // Predicated region
            $region40: #{tpu_custom_call.1} parent=27 // pred_check
              _
            $region41: #{tpu_custom_call.1} parent=27 // pred_check_branch
              %265 = sbr.rel target = $region43
            $region42: #{tpu_custom_call.1} parent=27 // pred_region
              _
            $region43: #{tpu_custom_call.1} parent=27 // pred_fallthru
              _
          $region28: #{tpu_custom_call.1} parent=23 // pred_fallthru
            _
          %266 = vnop
        $region24: #{tpu_custom_call.1} parent=15 // pred_fallthru
          _
        // Predicated region
        $region44: #{tpu_custom_call.1} parent=15 // pred_check
          %p267 = pneg %p108
        $region45: #{tpu_custom_call.1} parent=15 // pred_check_branch
          %269 = sbr.rel (%p267) target = $region47
        $region46: #{tpu_custom_call.1} parent=15 // pred_region
          %s270 = sand.u32 %s98, 1
          %s271 = sand.u32 %s98, 1
          %s272 = smul.addr %s271, 128
          %s273 = scalar_lea.vmem [#allocation7], %s272
          %s274 = smul.u32 %s19, 9
          %s275 = sadd.s32 %s274, %s20
          %s276 = smul.u32 8, %s275
          %s277 = smul.addr %s276, 4
          %s278 = scalar_lea.vmem %s2, %s277
          // Predicated region
          $region48: #{tpu_custom_call.1} parent=46 // pred_check
            _
          $region49: #{tpu_custom_call.1} parent=46 // pred_check_branch
            %280 = sbr.rel (0) target = $region51
          $region50: #{tpu_custom_call.1} parent=46 // pred_region
            // Predicated region
            $region52: #{tpu_custom_call.1} parent=50 // pred_check
              _
            $region53: #{tpu_custom_call.1} parent=50 // pred_check_branch
              %282 = sbr.rel (0) target = $region55
            $region54: #{tpu_custom_call.1} parent=50 // pred_region
              loop: start=0, step=1, limit=1
              $region56: #{tpu_custom_call.1} parent=54 // loop_pre_header
                _
              $region57: #{tpu_custom_call.1} parent=54 // loop_header
                %s284 = sphi 0, %s288
                %p285 = scmp.ge.s32.totalorder %s284, 1
                %s289 = sphi %s278, %s278
                %s290 = sphi %s273, %s273
              $region58: #{tpu_custom_call.1} parent=54 // loop_header_branch
                %287 = sbr.rel (%p285) target = $region62
              $region59: #{tpu_custom_call.1} parent=54 // loop_body
                %v291 = vld [vmem:[%s289] sm:$0xff]
                %292 = vst [vmem:[%s290] sm:$0xff] %v291
                %v293 = vld [vmem:[%s289 + $0x8] sm:$0xff]
                %294 = vst [vmem:[%s290 + $0x8] sm:$0xff] %v293
                %v295 = vld [vmem:[%s289 + $0x10] sm:$0xff]
                %296 = vst [vmem:[%s290 + $0x10] sm:$0xff] %v295
                %v297 = vld [vmem:[%s289 + $0x18] sm:$0xff]
                %298 = vst [vmem:[%s290 + $0x18] sm:$0xff] %v297
                %v299 = vld [vmem:[%s289 + $0x120] sm:$0xff]
                %300 = vst [vmem:[%s290 + $0x20] sm:$0xff] %v299
                %v301 = vld [vmem:[%s289 + $0x128] sm:$0xff]
                %302 = vst [vmem:[%s290 + $0x28] sm:$0xff] %v301
                %v303 = vld [vmem:[%s289 + $0x130] sm:$0xff]
                %304 = vst [vmem:[%s290 + $0x30] sm:$0xff] %v303
                %v305 = vld [vmem:[%s289 + $0x138] sm:$0xff]
                %306 = vst [vmem:[%s290 + $0x38] sm:$0xff] %v305
                %v307 = vld [vmem:[%s289 + $0x240] sm:$0xff]
                %308 = vst [vmem:[%s290 + $0x40] sm:$0xff] %v307
                %v309 = vld [vmem:[%s289 + $0x248] sm:$0xff]
                %310 = vst [vmem:[%s290 + $0x48] sm:$0xff] %v309
                %v311 = vld [vmem:[%s289 + $0x250] sm:$0xff]
                %312 = vst [vmem:[%s290 + $0x50] sm:$0xff] %v311
                %v313 = vld [vmem:[%s289 + $0x258] sm:$0xff]
                %314 = vst [vmem:[%s290 + $0x58] sm:$0xff] %v313
                %v315 = vld [vmem:[%s289 + $0x360] sm:$0xff]
                %316 = vst [vmem:[%s290 + $0x60] sm:$0xff] %v315
                %v317 = vld [vmem:[%s289 + $0x368] sm:$0xff]
                %318 = vst [vmem:[%s290 + $0x68] sm:$0xff] %v317
                %v319 = vld [vmem:[%s289 + $0x370] sm:$0xff]
                %320 = vst [vmem:[%s290 + $0x70] sm:$0xff] %v319
                %v321 = vld [vmem:[%s289 + $0x378] sm:$0xff]
                %322 = vst [vmem:[%s290 + $0x78] sm:$0xff] %v321
              $region60: #{tpu_custom_call.1} parent=54 // loop_footer
                %s288 = sadd.s32 1, %s284
              $region61: #{tpu_custom_call.1} parent=54 // loop_footer_branch
                %283 = sbr.rel target = $region57
              $region62: #{tpu_custom_call.1} parent=54 // loop_exit
                _
            $region55: #{tpu_custom_call.1} parent=50 // pred_fallthru
              _
            // Predicated region
            $region63: #{tpu_custom_call.1} parent=50 // pred_check
              _
            $region64: #{tpu_custom_call.1} parent=50 // pred_check_branch
              %324 = sbr.rel target = $region66
            $region65: #{tpu_custom_call.1} parent=50 // pred_region
              _
            $region66: #{tpu_custom_call.1} parent=50 // pred_fallthru
              _
          $region51: #{tpu_custom_call.1} parent=46 // pred_fallthru
            _
          %325 = vnop
        $region47: #{tpu_custom_call.1} parent=15 // pred_fallthru
          _
        // Predicated region
        $region67: #{tpu_custom_call.1} parent=15 // pred_check
          %p326 = pneg %p138
        $region68: #{tpu_custom_call.1} parent=15 // pred_check_branch
          %328 = sbr.rel (%p326) target = $region70
        $region69: #{tpu_custom_call.1} parent=15 // pred_region
          %s329 = sand.u32 %s128, 1
          %s330 = sand.u32 %s128, 1
          %s331 = smul.addr %s330, 32
          %s332 = scalar_lea.vmem [#allocation8], %s331
          %s333 = smul.u32 %s19, 9
          %s334 = sadd.s32 %s333, %s20
          %s335 = smul.u32 8, %s334
          %s336 = smul.addr %s335, 2
          %s337 = scalar_lea.vmem %s3, %s336
          // Predicated region
          $region71: #{tpu_custom_call.1} parent=69 // pred_check
            _
          $region72: #{tpu_custom_call.1} parent=69 // pred_check_branch
            %339 = sbr.rel (0) target = $region74
          $region73: #{tpu_custom_call.1} parent=69 // pred_region
            // Predicated region
            $region75: #{tpu_custom_call.1} parent=73 // pred_check
              _
            $region76: #{tpu_custom_call.1} parent=73 // pred_check_branch
              %341 = sbr.rel (0) target = $region78
            $region77: #{tpu_custom_call.1} parent=73 // pred_region
              loop: start=0, step=1, limit=1
              $region79: #{tpu_custom_call.1} parent=77 // loop_pre_header
                _
              $region80: #{tpu_custom_call.1} parent=77 // loop_header
                %s343 = sphi 0, %s347
                %p344 = scmp.ge.s32.totalorder %s343, 1
                %s348 = sphi %s337, %s337
                %s349 = sphi %s332, %s332
              $region81: #{tpu_custom_call.1} parent=77 // loop_header_branch
                %346 = sbr.rel (%p344) target = $region85
              $region82: #{tpu_custom_call.1} parent=77 // loop_body
                %v350 = vld [vmem:[%s348] sm:$0xff]
                %351 = vst [vmem:[%s349] sm:$0xff] %v350
                %v352 = vld [vmem:[%s348 + $0x8] sm:$0xff]
                %353 = vst [vmem:[%s349 + $0x8] sm:$0xff] %v352
                %v354 = vld [vmem:[%s348 + $0x90] sm:$0xff]
                %355 = vst [vmem:[%s349 + $0x10] sm:$0xff] %v354
                %v356 = vld [vmem:[%s348 + $0x98] sm:$0xff]
                %357 = vst [vmem:[%s349 + $0x18] sm:$0xff] %v356
              $region83: #{tpu_custom_call.1} parent=77 // loop_footer
                %s347 = sadd.s32 1, %s343
              $region84: #{tpu_custom_call.1} parent=77 // loop_footer_branch
                %342 = sbr.rel target = $region80
              $region85: #{tpu_custom_call.1} parent=77 // loop_exit
                _
            $region78: #{tpu_custom_call.1} parent=73 // pred_fallthru
              _
            // Predicated region
            $region86: #{tpu_custom_call.1} parent=73 // pred_check
              _
            $region87: #{tpu_custom_call.1} parent=73 // pred_check_branch
              %359 = sbr.rel target = $region89
            $region88: #{tpu_custom_call.1} parent=73 // pred_region
              _
            $region89: #{tpu_custom_call.1} parent=73 // pred_fallthru
              _
          $region74: #{tpu_custom_call.1} parent=69 // pred_fallthru
            _
          %360 = vnop
        $region70: #{tpu_custom_call.1} parent=15 // pred_fallthru
          _
        // Predicated region
        $region90: #{tpu_custom_call.1} parent=15 // pred_check
          %p361 = pneg %p168
        $region91: #{tpu_custom_call.1} parent=15 // pred_check_branch
          %363 = sbr.rel (%p361) target = $region93
        $region92: #{tpu_custom_call.1} parent=15 // pred_region
          %s364 = smul.u32 %s19, 9
          %s365 = sadd.s32 %s364, %s20
          %s366 = smul.u32 8, %s365
          %p367 = scmp.lt.s32.totalorder %s366, 71
          %s368 = scalar_select %p367, %s366, 71
          %s369 = smul.addr %s368, 2
          %s370 = scalar_lea.vmem %s4, %s369
          %s371 = smul.u32 %s19, 9
          %s372 = sadd.s32 %s371, %s20
          %s373 = smul.u32 8, %s372
        $region93: #{tpu_custom_call.1} parent=15 // pred_fallthru
          _
      $region16: #{tpu_custom_call.1} parent=5 // pred_fallthru
        _
      %p374 = scmp.le.s32.totalorder 1, %s12
      %p375 = scmp.lt.s32.totalorder %s12, 10
      %p376 = pnand %p374, %p375
      %p377 = pneg %p376
      // Predicated region
      $region94: #{tpu_custom_call.1} parent=5 // pred_check
        _
      $region95: #{tpu_custom_call.1} parent=5 // pred_check_branch
        %379 = sbr.rel (%p376) target = $region97
      $region96: #{tpu_custom_call.1} parent=5 // pred_region
        %s380 = ssub.s32 %s12, 1
        %s381 = sand.u32 %s71, 1
        %s382 = sand.u32 %s71, 1
        %s383 = smul.addr %s382, 32
        %s384 = scalar_lea.vmem [#allocation6], %s383
        // Predicated region
        $region98: #{tpu_custom_call.1} parent=96 // pred_check
          %p385 = pneg %p84
        $region99: #{tpu_custom_call.1} parent=96 // pred_check_branch
          %387 = sbr.rel (%p385) target = $region101
        $region100: #{tpu_custom_call.1} parent=96 // pred_region
          _
        $region101: #{tpu_custom_call.1} parent=96 // pred_fallthru
          _
        %s388 = sand.u32 %s101, 1
        %s389 = sand.u32 %s101, 1
        %s390 = smul.addr %s389, 128
        %s391 = scalar_lea.vmem [#allocation7], %s390
        // Predicated region
        $region102: #{tpu_custom_call.1} parent=96 // pred_check
          %p392 = pneg %p114
        $region103: #{tpu_custom_call.1} parent=96 // pred_check_branch
          %394 = sbr.rel (%p392) target = $region105
        $region104: #{tpu_custom_call.1} parent=96 // pred_region
          _
        $region105: #{tpu_custom_call.1} parent=96 // pred_fallthru
          _
        %s395 = sand.u32 %s131, 1
        %s396 = sand.u32 %s131, 1
        %s397 = smul.addr %s396, 32
        %s398 = scalar_lea.vmem [#allocation8], %s397
        // Predicated region
        $region106: #{tpu_custom_call.1} parent=96 // pred_check
          %p399 = pneg %p144
        $region107: #{tpu_custom_call.1} parent=96 // pred_check_branch
          %401 = sbr.rel (%p399) target = $region109
        $region108: #{tpu_custom_call.1} parent=96 // pred_region
          _
        $region109: #{tpu_custom_call.1} parent=96 // pred_fallthru
          _
        %s402 = smul.u32 %s21, 9
        %s403 = sadd.s32 %s402, %s22
        %s404 = smul.u32 8, %s403
        %p405 = scmp.lt.s32.totalorder %s404, 71
        %s406 = scalar_select %p405, %s404, 71
        %s407 = smul.addr %s406, 4
        %s408 = scalar_lea.vmem %s0, %s407
        %p409 = pneg %p54
        %p410 = pneg %p51
        %s411 = sand.u32 %s71, 1
        %s412 = sand.u32 %s71, 1
        %s413 = smul.addr %s412, 32
        %s414 = scalar_lea.vmem [#allocation6], %s413
        %p415 = pneg %p84
        %p416 = pneg %p81
        %s417 = sand.u32 %s101, 1
        %s418 = sand.u32 %s101, 1
        %s419 = smul.addr %s418, 128
        %s420 = scalar_lea.vmem [#allocation7], %s419
        %p421 = pneg %p114
        %p422 = pneg %p111
        %s423 = sand.u32 %s131, 1
        %s424 = sand.u32 %s131, 1
        %s425 = smul.addr %s424, 32
        %s426 = scalar_lea.vmem [#allocation8], %s425
        %p427 = pneg %p144
        %p428 = pneg %p141
        %s429 = smul.u32 %s21, 9
        %s430 = sadd.s32 %s429, %s22
        %s431 = smul.u32 8, %s430
        %p432 = scmp.lt.s32.totalorder %s431, 71
        %s433 = scalar_select %p432, %s431, 71
        %s434 = smul.addr %s433, 2
        %s435 = scalar_lea.vmem %s4, %s434
        %p436 = pneg %p174
        %p437 = pneg %p171
        %p438 = pneg %p200
        %p439 = pneg %p197
        %s440 = smul.u32 %s21, 9
        %s441 = sadd.s32 %s440, %s22
        %s442 = smul.u32 8, %s441
        %p443 = scmp.lt.s32.totalorder %s442, 71
        %s444 = scalar_select %p443, %s442, 71
        %s445 = smul.addr %s444, 4
        %s446 = scalar_lea.vmem %s0, %s445
        %s447 = smul.u32 %s21, 9
        %s448 = sadd.s32 %s447, %s22
        %s449 = smul.u32 8, %s448
        %s450 = smul.u32 %s21, 9
        %s451 = sadd.s32 %s450, %s22
        %s452 = smul.u32 8, %s451
        %s453 = smul.u32 %s21, 9
        %s454 = sadd.s32 %s453, %s22
        %s455 = smul.u32 8, %s454
        %s456 = smul.u32 %s21, 9
        %s457 = sadd.s32 %s456, %s22
        %s458 = smul.u32 8, %s457
        %s459 = smul.u32 %s21, 9
        %s460 = sadd.s32 %s459, %s22
        %s461 = smul.u32 8, %s460
        %p462 = scmp.lt.s32.totalorder %s461, 71
        %s463 = scalar_select %p462, %s461, 71
        %s464 = smul.addr %s463, 2
        %s465 = scalar_lea.vmem %s4, %s464
        %s466 = smul.u32 %s21, 9
        %s467 = sadd.s32 %s466, %s22
        %s468 = smul.u32 8, %s467
        %p469 = scmp.eq.s32.totalorder %s22, 0
        // Predicated region
        $region110: #{tpu_custom_call.1} parent=96 // pred_check
          %p470 = pneg %p469
        $region111: #{tpu_custom_call.1} parent=96 // pred_check_branch
          %472 = sbr.rel (%p470) target = $region113
        $region112: #{tpu_custom_call.1} parent=96 // pred_region
          %473 = vst [vmem:[#allocation2] sm:$0xff] 0.0
          %474 = vst [vmem:[#allocation2 + $0x8] sm:$0xff] 0.0
          %475 = vst [vmem:[#allocation3] sm:$0xff] 0.0
          %476 = vst [vmem:[#allocation3 + $0x8] sm:$0xff] 0.0
          %477 = vst [vmem:[#allocation4] sm:$0xff] 0.0
          %478 = vst [vmem:[#allocation4 + $0x8] sm:$0xff] 0.0
          %479 = vst [vmem:[#allocation4 + $0x10] sm:$0xff] 0.0
          %480 = vst [vmem:[#allocation4 + $0x18] sm:$0xff] 0.0
          %481 = vst [vmem:[#allocation5] sm:$0xff] 0.0
          %482 = vst [vmem:[#allocation5 + $0x8] sm:$0xff] 0.0
        $region113: #{tpu_custom_call.1} parent=96 // pred_fallthru
          _
        %v483 = vld [vmem:[%s391] sm:$0xff]
        %v484 = vld [vmem:[%s391 + $0x8] sm:$0xff]
        %v485 = vld [vmem:[%s391 + $0x10] sm:$0xff]
        %v486 = vld [vmem:[%s391 + $0x18] sm:$0xff]
        %v487 = vld [vmem:[%s391 + $0x20] sm:$0x11]
        %v488 = vld [vmem:[%s391 + $0x28] sm:$0x11]
        %v489 = vld [vmem:[%s391 + $0x30] sm:$0x11]
        %v490 = vld [vmem:[%s391 + $0x38] sm:$0x11]
        %v491 = vld [vmem:[%s391 + $0x40] sm:$0xff]
        %v492 = vld [vmem:[%s391 + $0x48] sm:$0xff]
        %v493 = vld [vmem:[%s391 + $0x50] sm:$0xff]
        %v494 = vld [vmem:[%s391 + $0x58] sm:$0xff]
        %v495 = vld [vmem:[%s391 + $0x60] sm:$0x11]
        %v496 = vld [vmem:[%s391 + $0x68] sm:$0x11]
        %v497 = vld [vmem:[%s391 + $0x70] sm:$0x11]
        %v498 = vld [vmem:[%s391 + $0x78] sm:$0x11]
        %v499 = vunpack.c.l.bf16 %v483
        %v500 = vunpack.c.h.bf16 %v483
        %v501 = vunpack.c.l.bf16 %v484
        %v502 = vunpack.c.h.bf16 %v484
        %v503 = vunpack.c.l.bf16 %v485
        %v504 = vunpack.c.h.bf16 %v485
        %v505 = vunpack.c.l.bf16 %v486
        %v506 = vunpack.c.h.bf16 %v486
        %v507 = vunpack.c.l.bf16 %v487
        %v508 = vunpack.c.h.bf16 %v487
        %v509 = vunpack.c.l.bf16 %v488
        %v510 = vunpack.c.h.bf16 %v488
        %v511 = vunpack.c.l.bf16 %v489
        %v512 = vunpack.c.h.bf16 %v489
        %v513 = vunpack.c.l.bf16 %v490
        %v514 = vunpack.c.h.bf16 %v490
        %v515 = vunpack.c.l.bf16 %v491
        %v516 = vunpack.c.h.bf16 %v491
        %v517 = vunpack.c.l.bf16 %v492
        %v518 = vunpack.c.h.bf16 %v492
        %v519 = vunpack.c.l.bf16 %v493
        %v520 = vunpack.c.h.bf16 %v493
        %v521 = vunpack.c.l.bf16 %v494
        %v522 = vunpack.c.h.bf16 %v494
        %v523 = vunpack.c.l.bf16 %v495
        %v524 = vunpack.c.h.bf16 %v495
        %v525 = vunpack.c.l.bf16 %v496
        %v526 = vunpack.c.h.bf16 %v496
        %v527 = vunpack.c.l.bf16 %v497
        %v528 = vunpack.c.h.bf16 %v497
        %v529 = vunpack.c.l.bf16 %v498
        %v530 = vunpack.c.h.bf16 %v498
        %v531 = vld [vmem:[%s465] sm:$0xff]
        %v532 = vld [vmem:[%s465 + $0x8] sm:$0xff]
        %vm533 = vcmask 1040384
        %v534 = vsel %vm533, %v507, -inf
        %v535 = vmax.f32 %v499, %v534
        %v536 = vrot.slane %v535, 4
        %v537 = vmax.f32 %v535, %v536
        %v538 = vrot.slane %v537, 2
        %v539 = vmax.f32 %v537, %v538
        %v540 = vrot.slane %v539, 1
        %v541 = vmax.f32 %v539, %v540
        %v542 = vsel %vm533, %v508, -inf
        %v543 = vmax.f32 %v500, %v542
        %v544 = vrot.slane %v543, 4
        %v545 = vmax.f32 %v543, %v544
        %v546 = vrot.slane %v545, 2
        %v547 = vmax.f32 %v545, %v546
        %v548 = vrot.slane %v547, 1
        %v549 = vmax.f32 %v547, %v548
        %v550 = vsel %vm533, %v509, -inf
        %v551 = vmax.f32 %v501, %v550
        %v552 = vrot.slane %v551, 4
        %v553 = vmax.f32 %v551, %v552
        %v554 = vrot.slane %v553, 2
        %v555 = vmax.f32 %v553, %v554
        %v556 = vrot.slane %v555, 1
        %v557 = vmax.f32 %v555, %v556
        %v558 = vsel %vm533, %v510, -inf
        %v559 = vmax.f32 %v502, %v558
        %v560 = vrot.slane %v559, 4
        %v561 = vmax.f32 %v559, %v560
        %v562 = vrot.slane %v561, 2
        %v563 = vmax.f32 %v561, %v562
        %v564 = vrot.slane %v563, 1
        %v565 = vmax.f32 %v563, %v564
        %v566 = vsel %vm533, %v511, -inf
        %v567 = vmax.f32 %v503, %v566
        %v568 = vrot.slane %v567, 4
        %v569 = vmax.f32 %v567, %v568
        %v570 = vrot.slane %v569, 2
        %v571 = vmax.f32 %v569, %v570
        %v572 = vrot.slane %v571, 1
        %v573 = vmax.f32 %v571, %v572
        %v574 = vsel %vm533, %v512, -inf
        %v575 = vmax.f32 %v504, %v574
        %v576 = vrot.slane %v575, 4
        %v577 = vmax.f32 %v575, %v576
        %v578 = vrot.slane %v577, 2
        %v579 = vmax.f32 %v577, %v578
        %v580 = vrot.slane %v579, 1
        %v581 = vmax.f32 %v579, %v580
        %v582 = vsel %vm533, %v513, -inf
        %v583 = vmax.f32 %v505, %v582
        %v584 = vrot.slane %v583, 4
        %v585 = vmax.f32 %v583, %v584
        %v586 = vrot.slane %v585, 2
        %v587 = vmax.f32 %v585, %v586
        %v588 = vrot.slane %v587, 1
        %v589 = vmax.f32 %v587, %v588
        %v590 = vsel %vm533, %v514, -inf
        %v591 = vmax.f32 %v506, %v590
        %v592 = vrot.slane %v591, 4
        %v593 = vmax.f32 %v591, %v592
        %v594 = vrot.slane %v593, 2
        %v595 = vmax.f32 %v593, %v594
        %v596 = vrot.slane %v595, 1
        %v597 = vmax.f32 %v595, %v596
        %v598 = vsel %vm533, %v523, -inf
        %v599 = vmax.f32 %v515, %v598
        %v600 = vrot.slane %v599, 4
        %v601 = vmax.f32 %v599, %v600
        %v602 = vrot.slane %v601, 2
        %v603 = vmax.f32 %v601, %v602
        %v604 = vrot.slane %v603, 1
        %v605 = vmax.f32 %v603, %v604
        %v606 = vsel %vm533, %v524, -inf
        %v607 = vmax.f32 %v516, %v606
        %v608 = vrot.slane %v607, 4
        %v609 = vmax.f32 %v607, %v608
        %v610 = vrot.slane %v609, 2
        %v611 = vmax.f32 %v609, %v610
        %v612 = vrot.slane %v611, 1
        %v613 = vmax.f32 %v611, %v612
        %v614 = vsel %vm533, %v525, -inf
        %v615 = vmax.f32 %v517, %v614
        %v616 = vrot.slane %v615, 4
        %v617 = vmax.f32 %v615, %v616
        %v618 = vrot.slane %v617, 2
        %v619 = vmax.f32 %v617, %v618
        %v620 = vrot.slane %v619, 1
        %v621 = vmax.f32 %v619, %v620
        %v622 = vsel %vm533, %v526, -inf
        %v623 = vmax.f32 %v518, %v622
        %v624 = vrot.slane %v623, 4
        %v625 = vmax.f32 %v623, %v624
        %v626 = vrot.slane %v625, 2
        %v627 = vmax.f32 %v625, %v626
        %v628 = vrot.slane %v627, 1
        %v629 = vmax.f32 %v627, %v628
        %v630 = vsel %vm533, %v527, -inf
        %v631 = vmax.f32 %v519, %v630
        %v632 = vrot.slane %v631, 4
        %v633 = vmax.f32 %v631, %v632
        %v634 = vrot.slane %v633, 2
        %v635 = vmax.f32 %v633, %v634
        %v636 = vrot.slane %v635, 1
        %v637 = vmax.f32 %v635, %v636
        %v638 = vsel %vm533, %v528, -inf
        %v639 = vmax.f32 %v520, %v638
        %v640 = vrot.slane %v639, 4
        %v641 = vmax.f32 %v639, %v640
        %v642 = vrot.slane %v641, 2
        %v643 = vmax.f32 %v641, %v642
        %v644 = vrot.slane %v643, 1
        %v645 = vmax.f32 %v643, %v644
        %v646 = vsel %vm533, %v529, -inf
        %v647 = vmax.f32 %v521, %v646
        %v648 = vrot.slane %v647, 4
        %v649 = vmax.f32 %v647, %v648
        %v650 = vrot.slane %v649, 2
        %v651 = vmax.f32 %v649, %v650
        %v652 = vrot.slane %v651, 1
        %v653 = vmax.f32 %v651, %v652
        %v654 = vsel %vm533, %v530, -inf
        %v655 = vmax.f32 %v522, %v654
        %v656 = vrot.slane %v655, 4
        %v657 = vmax.f32 %v655, %v656
        %v658 = vrot.slane %v657, 2
        %v659 = vmax.f32 %v657, %v658
        %v660 = vrot.slane %v659, 1
        %v661 = vmax.f32 %v659, %v660
        %v662 = vsub.f32 %v499, %v541
        %v663 = vsub.f32 %v500, %v549
        %v664 = vsub.f32 %v501, %v557
        %v665 = vsub.f32 %v502, %v565
        %v666 = vsub.f32 %v503, %v573
        %v667 = vsub.f32 %v504, %v581
        %v668 = vsub.f32 %v505, %v589
        %v669 = vsub.f32 %v506, %v597
        %v670 = vsub.f32 %v507, %v541
        %v671 = vsub.f32 %v508, %v549
        %v672 = vsub.f32 %v509, %v557
        %v673 = vsub.f32 %v510, %v565
        %v674 = vsub.f32 %v511, %v573
        %v675 = vsub.f32 %v512, %v581
        %v676 = vsub.f32 %v513, %v589
        %v677 = vsub.f32 %v514, %v597
        %v678 = vsub.f32 %v515, %v605
        %v679 = vsub.f32 %v516, %v613
        %v680 = vsub.f32 %v517, %v621
        %v681 = vsub.f32 %v518, %v629
        %v682 = vsub.f32 %v519, %v637
        %v683 = vsub.f32 %v520, %v645
        %v684 = vsub.f32 %v521, %v653
        %v685 = vsub.f32 %v522, %v661
        %v686 = vsub.f32 %v523, %v605
        %v687 = vsub.f32 %v524, %v613
        %v688 = vsub.f32 %v525, %v621
        %v689 = vsub.f32 %v526, %v629
        %v690 = vsub.f32 %v527, %v637
        %v691 = vsub.f32 %v528, %v645
        %v692 = vsub.f32 %v529, %v653
        %v693 = vsub.f32 %v530, %v661
        %v694 = vmul.f32 %v662, 1.442695
        %v695 = vpow.pop %v694
        %v696 = vmul.f32 %v663, 1.442695
        %v697 = vpow.pop %v696
        %v698 = vmul.f32 %v664, 1.442695
        %v699 = vpow.pop %v698
        %v700 = vmul.f32 %v665, 1.442695
        %v701 = vpow.pop %v700
        %v702 = vmul.f32 %v666, 1.442695
        %v703 = vpow.pop %v702
        %v704 = vmul.f32 %v667, 1.442695
        %v705 = vpow.pop %v704
        %v706 = vmul.f32 %v668, 1.442695
        %v707 = vpow.pop %v706
        %v708 = vmul.f32 %v669, 1.442695
        %v709 = vpow.pop %v708
        %v710 = vmul.f32 %v670, 1.442695
        %v711 = vpow.pop %v710
        %v712 = vmul.f32 %v671, 1.442695
        %v713 = vpow.pop %v712
        %v714 = vmul.f32 %v672, 1.442695
        %v715 = vpow.pop %v714
        %v716 = vmul.f32 %v673, 1.442695
        %v717 = vpow.pop %v716
        %v718 = vmul.f32 %v674, 1.442695
        %v719 = vpow.pop %v718
        %v720 = vmul.f32 %v675, 1.442695
        %v721 = vpow.pop %v720
        %v722 = vmul.f32 %v676, 1.442695
        %v723 = vpow.pop %v722
        %v724 = vmul.f32 %v677, 1.442695
        %v725 = vpow.pop %v724
        %v726 = vmul.f32 %v678, 1.442695
        %v727 = vpow.pop %v726
        %v728 = vmul.f32 %v679, 1.442695
        %v729 = vpow.pop %v728
        %v730 = vmul.f32 %v680, 1.442695
        %v731 = vpow.pop %v730
        %v732 = vmul.f32 %v681, 1.442695
        %v733 = vpow.pop %v732
        %v734 = vmul.f32 %v682, 1.442695
        %v735 = vpow.pop %v734
        %v736 = vmul.f32 %v683, 1.442695
        %v737 = vpow.pop %v736
        %v738 = vmul.f32 %v684, 1.442695
        %v739 = vpow.pop %v738
        %v740 = vmul.f32 %v685, 1.442695
        %v741 = vpow.pop %v740
        %v742 = vmul.f32 %v686, 1.442695
        %v743 = vpow.pop %v742
        %v744 = vmul.f32 %v687, 1.442695
        %v745 = vpow.pop %v744
        %v746 = vmul.f32 %v688, 1.442695
        %v747 = vpow.pop %v746
        %v748 = vmul.f32 %v689, 1.442695
        %v749 = vpow.pop %v748
        %v750 = vmul.f32 %v690, 1.442695
        %v751 = vpow.pop %v750
        %v752 = vmul.f32 %v691, 1.442695
        %v753 = vpow.pop %v752
        %v754 = vmul.f32 %v692, 1.442695
        %v755 = vpow.pop %v754
        %v756 = vmul.f32 %v693, 1.442695
        %v757 = vpow.pop %v756
        %v758 = vsel %vm533, %v711, 0.0
        %v759 = vadd.f32 %v695, %v758
        %v760 = vrot.slane %v759, 4
        %v761 = vadd.f32 %v759, %v760
        %v762 = vrot.slane %v761, 2
        %v763 = vadd.f32 %v761, %v762
        %v764 = vrot.slane %v763, 1
        %v765 = vadd.f32 %v763, %v764
        %v766 = vsel %vm533, %v713, 0.0
        %v767 = vadd.f32 %v697, %v766
        %v768 = vrot.slane %v767, 4
        %v769 = vadd.f32 %v767, %v768
        %v770 = vrot.slane %v769, 2
        %v771 = vadd.f32 %v769, %v770
        %v772 = vrot.slane %v771, 1
        %v773 = vadd.f32 %v771, %v772
        %v774 = vsel %vm533, %v715, 0.0
        %v775 = vadd.f32 %v699, %v774
        %v776 = vrot.slane %v775, 4
        %v777 = vadd.f32 %v775, %v776
        %v778 = vrot.slane %v777, 2
        %v779 = vadd.f32 %v777, %v778
        %v780 = vrot.slane %v779, 1
        %v781 = vadd.f32 %v779, %v780
        %v782 = vsel %vm533, %v717, 0.0
        %v783 = vadd.f32 %v701, %v782
        %v784 = vrot.slane %v783, 4
        %v785 = vadd.f32 %v783, %v784
        %v786 = vrot.slane %v785, 2
        %v787 = vadd.f32 %v785, %v786
        %v788 = vrot.slane %v787, 1
        %v789 = vadd.f32 %v787, %v788
        %v790 = vsel %vm533, %v719, 0.0
        %v791 = vadd.f32 %v703, %v790
        %v792 = vrot.slane %v791, 4
        %v793 = vadd.f32 %v791, %v792
        %v794 = vrot.slane %v793, 2
        %v795 = vadd.f32 %v793, %v794
        %v796 = vrot.slane %v795, 1
        %v797 = vadd.f32 %v795, %v796
        %v798 = vsel %vm533, %v721, 0.0
        %v799 = vadd.f32 %v705, %v798
        %v800 = vrot.slane %v799, 4
        %v801 = vadd.f32 %v799, %v800
        %v802 = vrot.slane %v801, 2
        %v803 = vadd.f32 %v801, %v802
        %v804 = vrot.slane %v803, 1
        %v805 = vadd.f32 %v803, %v804
        %v806 = vsel %vm533, %v723, 0.0
        %v807 = vadd.f32 %v707, %v806
        %v808 = vrot.slane %v807, 4
        %v809 = vadd.f32 %v807, %v808
        %v810 = vrot.slane %v809, 2
        %v811 = vadd.f32 %v809, %v810
        %v812 = vrot.slane %v811, 1
        %v813 = vadd.f32 %v811, %v812
        %v814 = vsel %vm533, %v725, 0.0
        %v815 = vadd.f32 %v709, %v814
        %v816 = vrot.slane %v815, 4
        %v817 = vadd.f32 %v815, %v816
        %v818 = vrot.slane %v817, 2
        %v819 = vadd.f32 %v817, %v818
        %v820 = vrot.slane %v819, 1
        %v821 = vadd.f32 %v819, %v820
        %v822 = vsel %vm533, %v743, 0.0
        %v823 = vadd.f32 %v727, %v822
        %v824 = vrot.slane %v823, 4
        %v825 = vadd.f32 %v823, %v824
        %v826 = vrot.slane %v825, 2
        %v827 = vadd.f32 %v825, %v826
        %v828 = vrot.slane %v827, 1
        %v829 = vadd.f32 %v827, %v828
        %v830 = vsel %vm533, %v745, 0.0
        %v831 = vadd.f32 %v729, %v830
        %v832 = vrot.slane %v831, 4
        %v833 = vadd.f32 %v831, %v832
        %v834 = vrot.slane %v833, 2
        %v835 = vadd.f32 %v833, %v834
        %v836 = vrot.slane %v835, 1
        %v837 = vadd.f32 %v835, %v836
        %v838 = vsel %vm533, %v747, 0.0
        %v839 = vadd.f32 %v731, %v838
        %v840 = vrot.slane %v839, 4
        %v841 = vadd.f32 %v839, %v840
        %v842 = vrot.slane %v841, 2
        %v843 = vadd.f32 %v841, %v842
        %v844 = vrot.slane %v843, 1
        %v845 = vadd.f32 %v843, %v844
        %v846 = vsel %vm533, %v749, 0.0
        %v847 = vadd.f32 %v733, %v846
        %v848 = vrot.slane %v847, 4
        %v849 = vadd.f32 %v847, %v848
        %v850 = vrot.slane %v849, 2
        %v851 = vadd.f32 %v849, %v850
        %v852 = vrot.slane %v851, 1
        %v853 = vadd.f32 %v851, %v852
        %v854 = vsel %vm533, %v751, 0.0
        %v855 = vadd.f32 %v735, %v854
        %v856 = vrot.slane %v855, 4
        %v857 = vadd.f32 %v855, %v856
        %v858 = vrot.slane %v857, 2
        %v859 = vadd.f32 %v857, %v858
        %v860 = vrot.slane %v859, 1
        %v861 = vadd.f32 %v859, %v860
        %v862 = vsel %vm533, %v753, 0.0
        %v863 = vadd.f32 %v737, %v862
        %v864 = vrot.slane %v863, 4
        %v865 = vadd.f32 %v863, %v864
        %v866 = vrot.slane %v865, 2
        %v867 = vadd.f32 %v865, %v866
        %v868 = vrot.slane %v867, 1
        %v869 = vadd.f32 %v867, %v868
        %v870 = vsel %vm533, %v755, 0.0
        %v871 = vadd.f32 %v739, %v870
        %v872 = vrot.slane %v871, 4
        %v873 = vadd.f32 %v871, %v872
        %v874 = vrot.slane %v873, 2
        %v875 = vadd.f32 %v873, %v874
        %v876 = vrot.slane %v875, 1
        %v877 = vadd.f32 %v875, %v876
        %v878 = vsel %vm533, %v757, 0.0
        %v879 = vadd.f32 %v741, %v878
        %v880 = vrot.slane %v879, 4
        %v881 = vadd.f32 %v879, %v880
        %v882 = vrot.slane %v881, 2
        %v883 = vadd.f32 %v881, %v882
        %v884 = vrot.slane %v883, 1
        %v885 = vadd.f32 %v883, %v884
        %v886 = vlog2.pop %v765
        %v887 = vmul.f32 %v886, 0.6931472
        %v888 = vlog2.pop %v773
        %v889 = vmul.f32 %v888, 0.6931472
        %v890 = vlog2.pop %v781
        %v891 = vmul.f32 %v890, 0.6931472
        %v892 = vlog2.pop %v789
        %v893 = vmul.f32 %v892, 0.6931472
        %v894 = vlog2.pop %v797
        %v895 = vmul.f32 %v894, 0.6931472
        %v896 = vlog2.pop %v805
        %v897 = vmul.f32 %v896, 0.6931472
        %v898 = vlog2.pop %v813
        %v899 = vmul.f32 %v898, 0.6931472
        %v900 = vlog2.pop %v821
        %v901 = vmul.f32 %v900, 0.6931472
        %v902 = vlog2.pop %v829
        %v903 = vmul.f32 %v902, 0.6931472
        %v904 = vlog2.pop %v837
        %v905 = vmul.f32 %v904, 0.6931472
        %v906 = vlog2.pop %v845
        %v907 = vmul.f32 %v906, 0.6931472
        %v908 = vlog2.pop %v853
        %v909 = vmul.f32 %v908, 0.6931472
        %v910 = vlog2.pop %v861
        %v911 = vmul.f32 %v910, 0.6931472
        %v912 = vlog2.pop %v869
        %v913 = vmul.f32 %v912, 0.6931472
        %v914 = vlog2.pop %v877
        %v915 = vmul.f32 %v914, 0.6931472
        %v916 = vlog2.pop %v885
        %v917 = vmul.f32 %v916, 0.6931472
        %v918 = vlaneseq
        %v919 = vshrl.u32 %v918, 7
        %v920 = vadd.s32 %v919, 8
        %v921 = vrot.slane %v531, 1
        %v922 = vrot.slane %v531, 2
        %v923 = vrot.slane %v531, 3
        %v924 = vrot.slane %v532, 4
        %v925 = vrot.slane %v532, 5
        %v926 = vrot.slane %v532, 6
        %v927 = vrot.slane %v532, 7
        %v928 = vsel %vm533, %v531, %v921
        %vm929 = vcmask 1042434
        %v930 = vsel %vm929, %v922, %v923
        %vm931 = vcmask 1041408
        %v932 = vsel %vm931, %v928, %v930
        %vm933 = vcmask 1044484
        %v934 = vsel %vm933, %v924, %v925
        %vm935 = vcmask 1046534
        %v936 = vsel %vm935, %v926, %v927
        %vm937 = vcmask 1045508
        %v938 = vsel %vm937, %v934, %v936
        %vm939 = vcmask 1043456
        %v940 = vsel %vm939, %v932, %v938
        %vm941 = vcmask 1041409
        %v942 = vsel %vm941, %v531, %v921
        %vm943 = vcmask 1043459
        %v944 = vsel %vm943, %v922, %v923
        %vm945 = vcmask 1042433
        %v946 = vsel %vm945, %v942, %v944
        %vm947 = vcmask 1045509
        %v948 = vsel %vm947, %v924, %v925
        %vm949 = vcmask 1046528
        %v950 = vsel %vm949, %v927, %v926
        %vm951 = vcmask 1046533
        %v952 = vsel %vm951, %v948, %v950
        %vm953 = vcmask 1044481
        %v954 = vsel %vm953, %v946, %v952
        %v955 = vrot.slane %v954, 1
        %v956 = vperm.slane %v940, 0
        %v957 = vperm.slane %v940, 1
        %v958 = vperm.slane %v940, 2
        %v959 = vperm.slane %v940, 3
        %v960 = vperm.slane %v940, 4
        %v961 = vperm.slane %v940, 5
        %v962 = vperm.slane %v940, 6
        %v963 = vperm.slane %v940, 7
        %v964 = vperm.slane %v955, 0
        %v965 = vperm.slane %v955, 1
        %v966 = vperm.slane %v955, 2
        %v967 = vperm.slane %v955, 3
        %v968 = vperm.slane %v955, 4
        %v969 = vperm.slane %v955, 5
        %v970 = vperm.slane %v955, 6
        %v971 = vperm.slane %v955, 7
        %vm972 = vcmp.eq.s32.totalorder %v919, %v956
        %vm973 = vcmp.eq.s32.totalorder %v919, %v957
        %vm974 = vcmp.eq.s32.totalorder %v919, %v958
        %vm975 = vcmp.eq.s32.totalorder %v919, %v959
        %vm976 = vcmp.eq.s32.totalorder %v919, %v960
        %vm977 = vcmp.eq.s32.totalorder %v919, %v961
        %vm978 = vcmp.eq.s32.totalorder %v919, %v962
        %vm979 = vcmp.eq.s32.totalorder %v919, %v963
        %vm980 = vcmp.eq.s32.totalorder %v920, %v956
        %vm981 = vcmp.eq.s32.totalorder %v920, %v957
        %vm982 = vcmp.eq.s32.totalorder %v920, %v958
        %vm983 = vcmp.eq.s32.totalorder %v920, %v959
        %vm984 = vcmp.eq.s32.totalorder %v920, %v960
        %vm985 = vcmp.eq.s32.totalorder %v920, %v961
        %vm986 = vcmp.eq.s32.totalorder %v920, %v962
        %vm987 = vcmp.eq.s32.totalorder %v920, %v963
        %vm988 = vcmp.eq.s32.totalorder %v919, %v964
        %vm989 = vcmp.eq.s32.totalorder %v919, %v965
        %vm990 = vcmp.eq.s32.totalorder %v919, %v966
        %vm991 = vcmp.eq.s32.totalorder %v919, %v967
        %vm992 = vcmp.eq.s32.totalorder %v919, %v968
        %vm993 = vcmp.eq.s32.totalorder %v919, %v969
        %vm994 = vcmp.eq.s32.totalorder %v919, %v970
        %vm995 = vcmp.eq.s32.totalorder %v919, %v971
        %vm996 = vcmp.eq.s32.totalorder %v920, %v964
        %vm997 = vcmp.eq.s32.totalorder %v920, %v965
        %vm998 = vcmp.eq.s32.totalorder %v920, %v966
        %vm999 = vcmp.eq.s32.totalorder %v920, %v967
        %vm1000 = vcmp.eq.s32.totalorder %v920, %v968
        %vm1001 = vcmp.eq.s32.totalorder %v920, %v969
        %vm1002 = vcmp.eq.s32.totalorder %v920, %v970
        %vm1003 = vcmp.eq.s32.totalorder %v920, %v971
        %v1004 = vsel %vm972, %v662, 0.0
        %v1005 = vsel %vm973, %v663, 0.0
        %v1006 = vsel %vm974, %v664, 0.0
        %v1007 = vsel %vm975, %v665, 0.0
        %v1008 = vsel %vm976, %v666, 0.0
        %v1009 = vsel %vm977, %v667, 0.0
        %v1010 = vsel %vm978, %v668, 0.0
        %v1011 = vsel %vm979, %v669, 0.0
        %v1012 = vsel %vm980, %v670, 0.0
        %v1013 = vsel %vm981, %v671, 0.0
        %v1014 = vsel %vm982, %v672, 0.0
        %v1015 = vsel %vm983, %v673, 0.0
        %v1016 = vsel %vm984, %v674, 0.0
        %v1017 = vsel %vm985, %v675, 0.0
        %v1018 = vsel %vm986, %v676, 0.0
        %v1019 = vsel %vm987, %v677, 0.0
        %v1020 = vsel %vm988, %v678, 0.0
        %v1021 = vsel %vm989, %v679, 0.0
        %v1022 = vsel %vm990, %v680, 0.0
        %v1023 = vsel %vm991, %v681, 0.0
        %v1024 = vsel %vm992, %v682, 0.0
        %v1025 = vsel %vm993, %v683, 0.0
        %v1026 = vsel %vm994, %v684, 0.0
        %v1027 = vsel %vm995, %v685, 0.0
        %v1028 = vsel %vm996, %v686, 0.0
        %v1029 = vsel %vm997, %v687, 0.0
        %v1030 = vsel %vm998, %v688, 0.0
        %v1031 = vsel %vm999, %v689, 0.0
        %v1032 = vsel %vm1000, %v690, 0.0
        %v1033 = vsel %vm1001, %v691, 0.0
        %v1034 = vsel %vm1002, %v692, 0.0
        %v1035 = vsel %vm1003, %v693, 0.0
        %v1036 = vsel %vm533, %v1012, 0.0
        %v1037 = vadd.f32 %v1004, %v1036
        %v1038 = vrot.slane %v1037, 4
        %v1039 = vadd.f32 %v1037, %v1038
        %v1040 = vrot.slane %v1039, 2
        %v1041 = vadd.f32 %v1039, %v1040
        %v1042 = vrot.slane %v1041, 1
        %v1043 = vadd.f32 %v1041, %v1042
        %v1044 = vsel %vm533, %v1013, 0.0
        %v1045 = vadd.f32 %v1005, %v1044
        %v1046 = vrot.slane %v1045, 4
        %v1047 = vadd.f32 %v1045, %v1046
        %v1048 = vrot.slane %v1047, 2
        %v1049 = vadd.f32 %v1047, %v1048
        %v1050 = vrot.slane %v1049, 1
        %v1051 = vadd.f32 %v1049, %v1050
        %v1052 = vsel %vm533, %v1014, 0.0
        %v1053 = vadd.f32 %v1006, %v1052
        %v1054 = vrot.slane %v1053, 4
        %v1055 = vadd.f32 %v1053, %v1054
        %v1056 = vrot.slane %v1055, 2
        %v1057 = vadd.f32 %v1055, %v1056
        %v1058 = vrot.slane %v1057, 1
        %v1059 = vadd.f32 %v1057, %v1058
        %v1060 = vsel %vm533, %v1015, 0.0
        %v1061 = vadd.f32 %v1007, %v1060
        %v1062 = vrot.slane %v1061, 4
        %v1063 = vadd.f32 %v1061, %v1062
        %v1064 = vrot.slane %v1063, 2
        %v1065 = vadd.f32 %v1063, %v1064
        %v1066 = vrot.slane %v1065, 1
        %v1067 = vadd.f32 %v1065, %v1066
        %v1068 = vsel %vm533, %v1016, 0.0
        %v1069 = vadd.f32 %v1008, %v1068
        %v1070 = vrot.slane %v1069, 4
        %v1071 = vadd.f32 %v1069, %v1070
        %v1072 = vrot.slane %v1071, 2
        %v1073 = vadd.f32 %v1071, %v1072
        %v1074 = vrot.slane %v1073, 1
        %v1075 = vadd.f32 %v1073, %v1074
        %v1076 = vsel %vm533, %v1017, 0.0
        %v1077 = vadd.f32 %v1009, %v1076
        %v1078 = vrot.slane %v1077, 4
        %v1079 = vadd.f32 %v1077, %v1078
        %v1080 = vrot.slane %v1079, 2
        %v1081 = vadd.f32 %v1079, %v1080
        %v1082 = vrot.slane %v1081, 1
        %v1083 = vadd.f32 %v1081, %v1082
        %v1084 = vsel %vm533, %v1018, 0.0
        %v1085 = vadd.f32 %v1010, %v1084
        %v1086 = vrot.slane %v1085, 4
        %v1087 = vadd.f32 %v1085, %v1086
        %v1088 = vrot.slane %v1087, 2
        %v1089 = vadd.f32 %v1087, %v1088
        %v1090 = vrot.slane %v1089, 1
        %v1091 = vadd.f32 %v1089, %v1090
        %v1092 = vsel %vm533, %v1019, 0.0
        %v1093 = vadd.f32 %v1011, %v1092
        %v1094 = vrot.slane %v1093, 4
        %v1095 = vadd.f32 %v1093, %v1094
        %v1096 = vrot.slane %v1095, 2
        %v1097 = vadd.f32 %v1095, %v1096
        %v1098 = vrot.slane %v1097, 1
        %v1099 = vadd.f32 %v1097, %v1098
        %v1100 = vsel %vm533, %v1028, 0.0
        %v1101 = vadd.f32 %v1020, %v1100
        %v1102 = vrot.slane %v1101, 4
        %v1103 = vadd.f32 %v1101, %v1102
        %v1104 = vrot.slane %v1103, 2
        %v1105 = vadd.f32 %v1103, %v1104
        %v1106 = vrot.slane %v1105, 1
        %v1107 = vadd.f32 %v1105, %v1106
        %v1108 = vsel %vm533, %v1029, 0.0
        %v1109 = vadd.f32 %v1021, %v1108
        %v1110 = vrot.slane %v1109, 4
        %v1111 = vadd.f32 %v1109, %v1110
        %v1112 = vrot.slane %v1111, 2
        %v1113 = vadd.f32 %v1111, %v1112
        %v1114 = vrot.slane %v1113, 1
        %v1115 = vadd.f32 %v1113, %v1114
        %v1116 = vsel %vm533, %v1030, 0.0
        %v1117 = vadd.f32 %v1022, %v1116
        %v1118 = vrot.slane %v1117, 4
        %v1119 = vadd.f32 %v1117, %v1118
        %v1120 = vrot.slane %v1119, 2
        %v1121 = vadd.f32 %v1119, %v1120
        %v1122 = vrot.slane %v1121, 1
        %v1123 = vadd.f32 %v1121, %v1122
        %v1124 = vsel %vm533, %v1031, 0.0
        %v1125 = vadd.f32 %v1023, %v1124
        %v1126 = vrot.slane %v1125, 4
        %v1127 = vadd.f32 %v1125, %v1126
        %v1128 = vrot.slane %v1127, 2
        %v1129 = vadd.f32 %v1127, %v1128
        %v1130 = vrot.slane %v1129, 1
        %v1131 = vadd.f32 %v1129, %v1130
        %v1132 = vsel %vm533, %v1032, 0.0
        %v1133 = vadd.f32 %v1024, %v1132
        %v1134 = vrot.slane %v1133, 4
        %v1135 = vadd.f32 %v1133, %v1134
        %v1136 = vrot.slane %v1135, 2
        %v1137 = vadd.f32 %v1135, %v1136
        %v1138 = vrot.slane %v1137, 1
        %v1139 = vadd.f32 %v1137, %v1138
        %v1140 = vsel %vm533, %v1033, 0.0
        %v1141 = vadd.f32 %v1025, %v1140
        %v1142 = vrot.slane %v1141, 4
        %v1143 = vadd.f32 %v1141, %v1142
        %v1144 = vrot.slane %v1143, 2
        %v1145 = vadd.f32 %v1143, %v1144
        %v1146 = vrot.slane %v1145, 1
        %v1147 = vadd.f32 %v1145, %v1146
        %v1148 = vsel %vm533, %v1034, 0.0
        %v1149 = vadd.f32 %v1026, %v1148
        %v1150 = vrot.slane %v1149, 4
        %v1151 = vadd.f32 %v1149, %v1150
        %v1152 = vrot.slane %v1151, 2
        %v1153 = vadd.f32 %v1151, %v1152
        %v1154 = vrot.slane %v1153, 1
        %v1155 = vadd.f32 %v1153, %v1154
        %v1156 = vsel %vm533, %v1035, 0.0
        %v1157 = vadd.f32 %v1027, %v1156
        %v1158 = vrot.slane %v1157, 4
        %v1159 = vadd.f32 %v1157, %v1158
        %v1160 = vrot.slane %v1159, 2
        %v1161 = vadd.f32 %v1159, %v1160
        %v1162 = vrot.slane %v1161, 1
        %v1163 = vadd.f32 %v1161, %v1162
        %v1164 = vsub.f32 %v1043, %v887
        %v1165 = vsub.f32 %v1051, %v889
        %v1166 = vsub.f32 %v1059, %v891
        %v1167 = vsub.f32 %v1067, %v893
        %v1168 = vsub.f32 %v1075, %v895
        %v1169 = vsub.f32 %v1083, %v897
        %v1170 = vsub.f32 %v1091, %v899
        %v1171 = vsub.f32 %v1099, %v901
        %v1172 = vsub.f32 %v1107, %v903
        %v1173 = vsub.f32 %v1115, %v905
        %v1174 = vsub.f32 %v1123, %v907
        %v1175 = vsub.f32 %v1131, %v909
        %v1176 = vsub.f32 %v1139, %v911
        %v1177 = vsub.f32 %v1147, %v913
        %v1178 = vsub.f32 %v1155, %v915
        %v1179 = vsub.f32 %v1163, %v917
        %v1180 = vmul.f32 %v1164, 1.442695
        %v1181 = vpow.pop %v1180
        %v1182 = vmul.f32 %v1165, 1.442695
        %v1183 = vpow.pop %v1182
        %v1184 = vmul.f32 %v1166, 1.442695
        %v1185 = vpow.pop %v1184
        %v1186 = vmul.f32 %v1167, 1.442695
        %v1187 = vpow.pop %v1186
        %v1188 = vmul.f32 %v1168, 1.442695
        %v1189 = vpow.pop %v1188
        %v1190 = vmul.f32 %v1169, 1.442695
        %v1191 = vpow.pop %v1190
        %v1192 = vmul.f32 %v1170, 1.442695
        %v1193 = vpow.pop %v1192
        %v1194 = vmul.f32 %v1171, 1.442695
        %v1195 = vpow.pop %v1194
        %v1196 = vmul.f32 %v1172, 1.442695
        %v1197 = vpow.pop %v1196
        %v1198 = vmul.f32 %v1173, 1.442695
        %v1199 = vpow.pop %v1198
        %v1200 = vmul.f32 %v1174, 1.442695
        %v1201 = vpow.pop %v1200
        %v1202 = vmul.f32 %v1175, 1.442695
        %v1203 = vpow.pop %v1202
        %v1204 = vmul.f32 %v1176, 1.442695
        %v1205 = vpow.pop %v1204
        %v1206 = vmul.f32 %v1177, 1.442695
        %v1207 = vpow.pop %v1206
        %v1208 = vmul.f32 %v1178, 1.442695
        %v1209 = vpow.pop %v1208
        %v1210 = vmul.f32 %v1179, 1.442695
        %v1211 = vpow.pop %v1210
        %s1212 = smul.u32 %s21, 9
        %s1213 = sadd.s32 %s1212, %s22
        %s1214 = smul.u32 %s1213, 1024
        %v1215 = vlaneseq
        %v1216 = vand.u32 %v1215, 127
        %v1217 = vadd.s32 %v1216, 128
        %v1218 = vadd.s32 %v1216, 256
        %v1219 = vadd.s32 %v1216, 384
        %v1220 = vadd.s32 %v1216, 512
        %v1221 = vadd.s32 %v1216, 640
        %v1222 = vadd.s32 %v1216, 768
        %v1223 = vadd.s32 %v1216, 896
        %v1224 = vstv %s1214
        %v1225 = vadd.s32 %v1224, %v1216
        %v1226 = vadd.s32 %v1224, %v1217
        %v1227 = vadd.s32 %v1224, %v1218
        %v1228 = vadd.s32 %v1224, %v1219
        %v1229 = vadd.s32 %v1224, %v1220
        %v1230 = vadd.s32 %v1224, %v1221
        %v1231 = vadd.s32 %v1224, %v1222
        %v1232 = vadd.s32 %v1224, %v1223
        %vm1233 = vcmp.lt.s32.totalorder %v1225, 8732
        %vm1234 = vcmp.lt.s32.totalorder %v1226, 8732
        %vm1235 = vcmp.lt.s32.totalorder %v1227, 8732
        %vm1236 = vcmp.lt.s32.totalorder %v1228, 8732
        %vm1237 = vcmp.lt.s32.totalorder %v1229, 8732
        %vm1238 = vcmp.lt.s32.totalorder %v1230, 8732
        %vm1239 = vcmp.lt.s32.totalorder %v1231, 8732
        %vm1240 = vcmp.lt.s32.totalorder %v1232, 8732
        %v1257 = vsel %vm941, %v1172, %v1164
        %v1258 = vsel %vm941, %v1173, %v1165
        %v1259 = vsel %vm941, %v1174, %v1166
        %v1260 = vsel %vm941, %v1175, %v1167
        %v1261 = vsel %vm941, %v1176, %v1168
        %v1262 = vsel %vm941, %v1177, %v1169
        %v1263 = vsel %vm941, %v1178, %v1170
        %v1264 = vsel %vm941, %v1179, %v1171
        %v1273 = vsel %vm1233, %v1257, 0.0
        %v1274 = vsel %vm1234, %v1258, 0.0
        %v1275 = vsel %vm1235, %v1259, 0.0
        %v1276 = vsel %vm1236, %v1260, 0.0
        %v1277 = vsel %vm1237, %v1261, 0.0
        %v1278 = vsel %vm1238, %v1262, 0.0
        %v1279 = vsel %vm1239, %v1263, 0.0
        %v1280 = vsel %vm1240, %v1264, 0.0
        %vm1281 = vcmp.eq.s32.totalorder %v531, 0
        %vm1282 = vcmp.eq.s32.totalorder %v532, 0
        %v1283 = vsel %vm1281, 0.01, 1.0
        %v1284 = vsel %vm1282, 0.01, 1.0
        %v1285 = vsub.f32 1.0, %v1181
        %v1286 = vsub.f32 1.0, %v1183
        %v1287 = vsub.f32 1.0, %v1185
        %v1288 = vsub.f32 1.0, %v1187
        %v1289 = vsub.f32 1.0, %v1189
        %v1290 = vsub.f32 1.0, %v1191
        %v1291 = vsub.f32 1.0, %v1193
        %v1292 = vsub.f32 1.0, %v1195
        %v1293 = vsub.f32 1.0, %v1197
        %v1294 = vsub.f32 1.0, %v1199
        %v1295 = vsub.f32 1.0, %v1201
        %v1296 = vsub.f32 1.0, %v1203
        %v1297 = vsub.f32 1.0, %v1205
        %v1298 = vsub.f32 1.0, %v1207
        %v1299 = vsub.f32 1.0, %v1209
        %v1300 = vsub.f32 1.0, %v1211
        %v1301 = vld [vmem:[#allocation2] sm:$0xff]
        %v1302 = vld [vmem:[#allocation2 + $0x8] sm:$0xff]
        %v1311 = vrot.slane %v1274, 6
        %v1312 = vrot.slane %v1275, 4
        %v1313 = vrot.slane %v1276, 2
        %v1314 = vrot.slane %v1278, 6
        %v1315 = vrot.slane %v1279, 4
        %v1316 = vrot.slane %v1280, 2
        %v1317 = vsel %vm931, %v1273, %v1311
        %v1318 = vsel %vm937, %v1312, %v1313
        %v1319 = vsel %vm939, %v1317, %v1318
        %v1320 = vsel %vm931, %v1277, %v1314
        %v1321 = vsel %vm937, %v1315, %v1316
        %v1322 = vsel %vm939, %v1320, %v1321
        %v1325 = vadd.f32 %v1301, %v1319
        %v1326 = vadd.f32 %v1302, %v1322
        %1327 = vst [vmem:[#allocation2] sm:$0xff] %v1325
        %1328 = vst [vmem:[#allocation2 + $0x8] sm:$0xff] %v1326
        %v1329 = vld [vmem:[#allocation3] sm:$0xff]
        %v1330 = vld [vmem:[#allocation3 + $0x8] sm:$0xff]
        %v1331 = vmul.f32 %v1285, %v1285
        %v1332 = vmul.f32 %v1286, %v1286
        %v1333 = vmul.f32 %v1287, %v1287
        %v1334 = vmul.f32 %v1288, %v1288
        %v1335 = vmul.f32 %v1289, %v1289
        %v1336 = vmul.f32 %v1290, %v1290
        %v1337 = vmul.f32 %v1291, %v1291
        %v1338 = vmul.f32 %v1292, %v1292
        %v1339 = vmul.f32 %v1293, %v1293
        %v1340 = vmul.f32 %v1294, %v1294
        %v1341 = vmul.f32 %v1295, %v1295
        %v1342 = vmul.f32 %v1296, %v1296
        %v1343 = vmul.f32 %v1297, %v1297
        %v1344 = vmul.f32 %v1298, %v1298
        %v1345 = vmul.f32 %v1299, %v1299
        %v1346 = vmul.f32 %v1300, %v1300
        %v1363 = vrot.slane %v1332, 6
        %v1364 = vrot.slane %v1333, 4
        %v1365 = vrot.slane %v1334, 2
        %v1366 = vrot.slane %v1336, 6
        %v1367 = vrot.slane %v1337, 4
        %v1368 = vrot.slane %v1338, 2
        %v1369 = vrot.slane %v1340, 6
        %v1370 = vrot.slane %v1341, 4
        %v1371 = vrot.slane %v1342, 2
        %v1372 = vrot.slane %v1344, 6
        %v1373 = vrot.slane %v1345, 4
        %v1374 = vrot.slane %v1346, 2
        %v1375 = vsel %vm931, %v1331, %v1363
        %v1376 = vsel %vm937, %v1364, %v1365
        %v1377 = vsel %vm939, %v1375, %v1376
        %v1378 = vsel %vm931, %v1335, %v1366
        %v1379 = vsel %vm937, %v1367, %v1368
        %v1380 = vsel %vm939, %v1378, %v1379
        %v1381 = vsel %vm931, %v1339, %v1369
        %v1382 = vsel %vm937, %v1370, %v1371
        %v1383 = vsel %vm939, %v1381, %v1382
        %v1384 = vsel %vm931, %v1343, %v1372
        %v1385 = vsel %vm937, %v1373, %v1374
        %v1386 = vsel %vm939, %v1384, %v1385
        %v1387 = vsel %vm933, %v1377, %v1377
        %v1388 = vsel %vm935, %v1377, %v1387
        %v1389 = vrot.slane %v1383, 7
        %v1390 = vsel %vm941, %v1389, %v1388
        %v1391 = vsel %vm943, %v1389, %v1390
        %v1392 = vsel %vm947, %v1389, %v1391
        %vm1393 = vcmask 1047559
        %v1394 = vsel %vm1393, %v1389, %v1392
        %v1395 = vsel %vm933, %v1380, %v1380
        %v1396 = vsel %vm935, %v1380, %v1395
        %v1397 = vrot.slane %v1386, 7
        %v1398 = vsel %vm941, %v1397, %v1396
        %v1399 = vsel %vm943, %v1397, %v1398
        %v1400 = vsel %vm947, %v1397, %v1399
        %v1401 = vsel %vm1393, %v1397, %v1400
        %v1404 = vmul.f32 %v1283, %v1394
        %v1405 = vmul.f32 %v1284, %v1401
        %v1406 = vmul.f32 %v1404, %v1319
        %v1407 = vmul.f32 %v1405, %v1322
        %v1408 = vadd.f32 %v1329, %v1406
        %v1409 = vadd.f32 %v1330, %v1407
        %1410 = vst [vmem:[#allocation3] sm:$0xff] %v1408
        %1411 = vst [vmem:[#allocation3 + $0x8] sm:$0xff] %v1409
        %v1412 = vld [vmem:[%s446] sm:$0xff]
        %v1413 = vld [vmem:[%s446 + $0x8] sm:$0xff]
        %v1414 = vld [vmem:[%s446 + $0x10] sm:$0xff]
        %v1415 = vld [vmem:[%s446 + $0x18] sm:$0xff]
        %v1416 = vld [vmem:[%s398] sm:$0xff]
        %v1417 = vld [vmem:[%s398 + $0x8] sm:$0xff]
        %v1418 = vld [vmem:[%s398 + $0x10] sm:$0xff]
        %v1419 = vld [vmem:[%s398 + $0x18] sm:$0xff]
        %v1420 = vunpack.c.l.bf16 %v1416
        %v1421 = vunpack.c.h.bf16 %v1416
        %v1422 = vunpack.c.l.bf16 %v1417
        %v1423 = vunpack.c.h.bf16 %v1417
        %v1424 = vunpack.c.l.bf16 %v1418
        %v1425 = vunpack.c.h.bf16 %v1418
        %v1426 = vunpack.c.l.bf16 %v1419
        %v1427 = vunpack.c.h.bf16 %v1419
        %v1428 = vsub.f32 %v1420, %v1412
        %v1429 = vsub.f32 %v1421, %v1413
        %v1430 = vsub.f32 %v1422, %v1414
        %v1431 = vsub.f32 %v1423, %v1415
        %v1432 = vsub.f32 %v1424, %v1412
        %v1433 = vsub.f32 %v1425, %v1413
        %v1434 = vsub.f32 %v1426, %v1414
        %v1435 = vsub.f32 %v1427, %v1415
        %v1436 = vmul.f32 %v1428, 10.0
        %v1437 = vmul.f32 %v1429, 10.0
        %v1438 = vmul.f32 %v1430, 10.0
        %v1439 = vmul.f32 %v1431, 10.0
        %v1440 = vmul.f32 %v1432, 10.0
        %v1441 = vmul.f32 %v1433, 10.0
        %v1442 = vmul.f32 %v1434, 10.0
        %v1443 = vmul.f32 %v1435, 10.0
        %v1448 = vrot.slane %v1412, 6
        %v1449 = vrot.slane %v1448, 4
        %v1450 = vrot.slane %v1413, 6
        %v1451 = vrot.slane %v1450, 4
        %v1452 = vrot.slane %v1414, 6
        %v1453 = vrot.slane %v1452, 4
        %v1454 = vrot.slane %v1415, 6
        %v1455 = vrot.slane %v1454, 4
        %v1460 = vmul.f32 %v1436, %v1449
        %v1461 = vmul.f32 %v1437, %v1451
        %v1462 = vmul.f32 %v1438, %v1453
        %v1463 = vmul.f32 %v1439, %v1455
        %v1464 = vmul.f32 %v1440, %v1449
        %v1465 = vmul.f32 %v1441, %v1451
        %v1466 = vmul.f32 %v1442, %v1453
        %v1467 = vmul.f32 %v1443, %v1455
        %v1468 = vmul.f32 %v1420, %v1412
        %v1469 = vmul.f32 %v1421, %v1413
        %v1470 = vmul.f32 %v1422, %v1414
        %v1471 = vmul.f32 %v1423, %v1415
        %v1472 = vmul.f32 %v1424, %v1412
        %v1473 = vmul.f32 %v1425, %v1413
        %v1474 = vmul.f32 %v1426, %v1414
        %v1475 = vmul.f32 %v1427, %v1415
        %v1476 = vlog2.pop %v1468
        %v1477 = vmul.f32 %v1476, 0.6931472
        %v1478 = vlog2.pop %v1469
        %v1479 = vmul.f32 %v1478, 0.6931472
        %v1480 = vlog2.pop %v1470
        %v1481 = vmul.f32 %v1480, 0.6931472
        %v1482 = vlog2.pop %v1471
        %v1483 = vmul.f32 %v1482, 0.6931472
        %v1484 = vlog2.pop %v1472
        %v1485 = vmul.f32 %v1484, 0.6931472
        %v1486 = vlog2.pop %v1473
        %v1487 = vmul.f32 %v1486, 0.6931472
        %v1488 = vlog2.pop %v1474
        %v1489 = vmul.f32 %v1488, 0.6931472
        %v1490 = vlog2.pop %v1475
        %v1491 = vmul.f32 %v1490, 0.6931472
        %v1492 = vmul.f32 %v1477, 5.0
        %v1493 = vmul.f32 %v1479, 5.0
        %v1494 = vmul.f32 %v1481, 5.0
        %v1495 = vmul.f32 %v1483, 5.0
        %v1496 = vmul.f32 %v1485, 5.0
        %v1497 = vmul.f32 %v1487, 5.0
        %v1498 = vmul.f32 %v1489, 5.0
        %v1499 = vmul.f32 %v1491, 5.0
        %v1500 = vld [vmem:[%s384] sm:$0xff]
        %v1501 = vld [vmem:[%s384 + $0x8] sm:$0xff]
        %v1502 = vld [vmem:[%s384 + $0x10] sm:$0xff]
        %v1503 = vld [vmem:[%s384 + $0x18] sm:$0xff]
        %v1504 = vunpack.c.l.bf16 %v1500
        %v1505 = vunpack.c.h.bf16 %v1500
        %v1506 = vunpack.c.l.bf16 %v1501
        %v1507 = vunpack.c.h.bf16 %v1501
        %v1508 = vunpack.c.l.bf16 %v1502
        %v1509 = vunpack.c.h.bf16 %v1502
        %v1510 = vunpack.c.l.bf16 %v1503
        %v1511 = vunpack.c.h.bf16 %v1503
        %vm1512 = vcmp.gt.s32.totalorder %v531, 0
        %vm1513 = vcmp.gt.s32.totalorder %v532, 0
        %v1514 = vld [vmem:[#allocation4] sm:$0xff]
        %v1515 = vld [vmem:[#allocation4 + $0x8] sm:$0xff]
        %v1516 = vld [vmem:[#allocation4 + $0x10] sm:$0xff]
        %v1517 = vld [vmem:[#allocation4 + $0x18] sm:$0xff]
        %v1518 = vsel %vm1512, 1, 0
        %v1519 = vsel %vm1513, 1, 0
        %v1520 = vrot.slane %v1518, 1
        %v1521 = vrot.slane %v1518, 2
        %v1522 = vrot.slane %v1518, 3
        %v1523 = vrot.slane %v1519, 4
        %v1524 = vrot.slane %v1519, 5
        %v1525 = vrot.slane %v1519, 6
        %v1526 = vrot.slane %v1519, 7
        %v1527 = vsel %vm533, %v1518, %v1520
        %v1528 = vsel %vm929, %v1521, %v1522
        %v1529 = vsel %vm931, %v1527, %v1528
        %v1530 = vsel %vm933, %v1523, %v1524
        %v1531 = vsel %vm935, %v1525, %v1526
        %v1532 = vsel %vm937, %v1530, %v1531
        %v1533 = vsel %vm939, %v1529, %v1532
        %v1534 = vsel %vm941, %v1518, %v1520
        %v1535 = vsel %vm943, %v1521, %v1522
        %v1536 = vsel %vm945, %v1534, %v1535
        %v1537 = vsel %vm947, %v1523, %v1524
        %v1538 = vsel %vm949, %v1526, %v1525
        %v1539 = vsel %vm951, %v1537, %v1538
        %v1540 = vsel %vm953, %v1536, %v1539
        %v1541 = vrot.slane %v1540, 1
        %vm1542 = vcmp.ne.s32.totalorder %v1533, 0
        %vm1543 = vcmp.ne.s32.totalorder %v1541, 0
        %v1544 = vsub.f32 %v1504, %v1460
        %v1545 = vsub.f32 %v1505, %v1461
        %v1546 = vsub.f32 %v1506, %v1462
        %v1547 = vsub.f32 %v1507, %v1463
        %v1548 = vsub.f32 %v1508, %v1464
        %v1549 = vsub.f32 %v1509, %v1465
        %v1550 = vsub.f32 %v1510, %v1466
        %v1551 = vsub.f32 %v1511, %v1467
        %v1552 = vand.u32 2147483647, %v1544
        %v1553 = vand.u32 2147483647, %v1545
        %v1554 = vand.u32 2147483647, %v1546
        %v1555 = vand.u32 2147483647, %v1547
        %v1556 = vand.u32 2147483647, %v1548
        %v1557 = vand.u32 2147483647, %v1549
        %v1558 = vand.u32 2147483647, %v1550
        %v1559 = vand.u32 2147483647, %v1551
        %vm1560 = vcmp.lt.f32.partialorder %v1552, 1.0
        %vm1561 = vcmp.lt.f32.partialorder %v1553, 1.0
        %vm1562 = vcmp.lt.f32.partialorder %v1554, 1.0
        %vm1563 = vcmp.lt.f32.partialorder %v1555, 1.0
        %vm1564 = vcmp.lt.f32.partialorder %v1556, 1.0
        %vm1565 = vcmp.lt.f32.partialorder %v1557, 1.0
        %vm1566 = vcmp.lt.f32.partialorder %v1558, 1.0
        %vm1567 = vcmp.lt.f32.partialorder %v1559, 1.0
        %v1568 = vmul.f32 %v1552, 0.5
        %v1569 = vmul.f32 %v1553, 0.5
        %v1570 = vmul.f32 %v1554, 0.5
        %v1571 = vmul.f32 %v1555, 0.5
        %v1572 = vmul.f32 %v1556, 0.5
        %v1573 = vmul.f32 %v1557, 0.5
        %v1574 = vmul.f32 %v1558, 0.5
        %v1575 = vmul.f32 %v1559, 0.5
        %v1576 = vmul.f32 %v1568, %v1552
        %v1577 = vmul.f32 %v1569, %v1553
        %v1578 = vmul.f32 %v1570, %v1554
        %v1579 = vmul.f32 %v1571, %v1555
        %v1580 = vmul.f32 %v1572, %v1556
        %v1581 = vmul.f32 %v1573, %v1557
        %v1582 = vmul.f32 %v1574, %v1558
        %v1583 = vmul.f32 %v1575, %v1559
        %v1584 = vsub.f32 %v1552, 0.5
        %v1585 = vsub.f32 %v1553, 0.5
        %v1586 = vsub.f32 %v1554, 0.5
        %v1587 = vsub.f32 %v1555, 0.5
        %v1588 = vsub.f32 %v1556, 0.5
        %v1589 = vsub.f32 %v1557, 0.5
        %v1590 = vsub.f32 %v1558, 0.5
        %v1591 = vsub.f32 %v1559, 0.5
        %v1592 = vsel %vm1560, %v1576, %v1584
        %v1593 = vsel %vm1561, %v1577, %v1585
        %v1594 = vsel %vm1562, %v1578, %v1586
        %v1595 = vsel %vm1563, %v1579, %v1587
        %v1596 = vsel %vm1564, %v1580, %v1588
        %v1597 = vsel %vm1565, %v1581, %v1589
        %v1598 = vsel %vm1566, %v1582, %v1590
        %v1599 = vsel %vm1567, %v1583, %v1591
        %v1600 = vsub.f32 %v1504, %v1492
        %v1601 = vsub.f32 %v1505, %v1493
        %v1602 = vsub.f32 %v1506, %v1494
        %v1603 = vsub.f32 %v1507, %v1495
        %v1604 = vsub.f32 %v1508, %v1496
        %v1605 = vsub.f32 %v1509, %v1497
        %v1606 = vsub.f32 %v1510, %v1498
        %v1607 = vsub.f32 %v1511, %v1499
        %v1608 = vand.u32 2147483647, %v1600
        %v1609 = vand.u32 2147483647, %v1601
        %v1610 = vand.u32 2147483647, %v1602
        %v1611 = vand.u32 2147483647, %v1603
        %v1612 = vand.u32 2147483647, %v1604
        %v1613 = vand.u32 2147483647, %v1605
        %v1614 = vand.u32 2147483647, %v1606
        %v1615 = vand.u32 2147483647, %v1607
        %vm1616 = vcmp.lt.f32.partialorder %v1608, 1.0
        %vm1617 = vcmp.lt.f32.partialorder %v1609, 1.0
        %vm1618 = vcmp.lt.f32.partialorder %v1610, 1.0
        %vm1619 = vcmp.lt.f32.partialorder %v1611, 1.0
        %vm1620 = vcmp.lt.f32.partialorder %v1612, 1.0
        %vm1621 = vcmp.lt.f32.partialorder %v1613, 1.0
        %vm1622 = vcmp.lt.f32.partialorder %v1614, 1.0
        %vm1623 = vcmp.lt.f32.partialorder %v1615, 1.0
        %v1624 = vmul.f32 %v1608, 0.5
        %v1625 = vmul.f32 %v1609, 0.5
        %v1626 = vmul.f32 %v1610, 0.5
        %v1627 = vmul.f32 %v1611, 0.5
        %v1628 = vmul.f32 %v1612, 0.5
        %v1629 = vmul.f32 %v1613, 0.5
        %v1630 = vmul.f32 %v1614, 0.5
        %v1631 = vmul.f32 %v1615, 0.5
        %v1632 = vmul.f32 %v1624, %v1608
        %v1633 = vmul.f32 %v1625, %v1609
        %v1634 = vmul.f32 %v1626, %v1610
        %v1635 = vmul.f32 %v1627, %v1611
        %v1636 = vmul.f32 %v1628, %v1612
        %v1637 = vmul.f32 %v1629, %v1613
        %v1638 = vmul.f32 %v1630, %v1614
        %v1639 = vmul.f32 %v1631, %v1615
        %v1640 = vsub.f32 %v1608, 0.5
        %v1641 = vsub.f32 %v1609, 0.5
        %v1642 = vsub.f32 %v1610, 0.5
        %v1643 = vsub.f32 %v1611, 0.5
        %v1644 = vsub.f32 %v1612, 0.5
        %v1645 = vsub.f32 %v1613, 0.5
        %v1646 = vsub.f32 %v1614, 0.5
        %v1647 = vsub.f32 %v1615, 0.5
        %v1648 = vsel %vm1616, %v1632, %v1640
        %v1649 = vsel %vm1617, %v1633, %v1641
        %v1650 = vsel %vm1618, %v1634, %v1642
        %v1651 = vsel %vm1619, %v1635, %v1643
        %v1652 = vsel %vm1620, %v1636, %v1644
        %v1653 = vsel %vm1621, %v1637, %v1645
        %v1654 = vsel %vm1622, %v1638, %v1646
        %v1655 = vsel %vm1623, %v1639, %v1647
        %v1664 = vrot.slane %v1648, 6
        %v1665 = vrot.slane %v1664, 4
        %v1666 = vrot.slane %v1649, 6
        %v1667 = vrot.slane %v1666, 4
        %v1668 = vrot.slane %v1650, 6
        %v1669 = vrot.slane %v1668, 4
        %v1670 = vrot.slane %v1651, 6
        %v1671 = vrot.slane %v1670, 4
        %v1672 = vrot.slane %v1652, 6
        %v1673 = vrot.slane %v1672, 4
        %v1674 = vrot.slane %v1653, 6
        %v1675 = vrot.slane %v1674, 4
        %v1676 = vrot.slane %v1654, 6
        %v1677 = vrot.slane %v1676, 4
        %v1678 = vrot.slane %v1655, 6
        %v1679 = vrot.slane %v1678, 4
        %v1688 = vadd.f32 %v1592, %v1665
        %v1689 = vadd.f32 %v1593, %v1667
        %v1690 = vadd.f32 %v1594, %v1669
        %v1691 = vadd.f32 %v1595, %v1671
        %v1692 = vadd.f32 %v1596, %v1673
        %v1693 = vadd.f32 %v1597, %v1675
        %v1694 = vadd.f32 %v1598, %v1677
        %v1695 = vadd.f32 %v1599, %v1679
        %v1696 = vsel %vm1542, 1, 0
        %v1697 = vsel %vm1543, 1, 0
        %v1698 = vperm.slane %v1696, 0
        %v1699 = vperm.slane %v1696, 1
        %v1700 = vperm.slane %v1696, 2
        %v1701 = vperm.slane %v1696, 3
        %v1702 = vperm.slane %v1696, 4
        %v1703 = vperm.slane %v1696, 5
        %v1704 = vperm.slane %v1696, 6
        %v1705 = vperm.slane %v1696, 7
        %v1706 = vperm.slane %v1697, 0
        %v1707 = vperm.slane %v1697, 1
        %v1708 = vperm.slane %v1697, 2
        %v1709 = vperm.slane %v1697, 3
        %v1710 = vperm.slane %v1697, 4
        %v1711 = vperm.slane %v1697, 5
        %v1712 = vperm.slane %v1697, 6
        %v1713 = vperm.slane %v1697, 7
        %vm1714 = vcmp.eq.s32.totalorder %v1698, 1
        %vm1715 = vcmp.eq.s32.totalorder %v1699, 1
        %vm1716 = vcmp.eq.s32.totalorder %v1700, 1
        %vm1717 = vcmp.eq.s32.totalorder %v1701, 1
        %vm1718 = vcmp.eq.s32.totalorder %v1702, 1
        %vm1719 = vcmp.eq.s32.totalorder %v1703, 1
        %vm1720 = vcmp.eq.s32.totalorder %v1704, 1
        %vm1721 = vcmp.eq.s32.totalorder %v1705, 1
        %vm1722 = vcmp.eq.s32.totalorder %v1706, 1
        %vm1723 = vcmp.eq.s32.totalorder %v1707, 1
        %vm1724 = vcmp.eq.s32.totalorder %v1708, 1
        %vm1725 = vcmp.eq.s32.totalorder %v1709, 1
        %vm1726 = vcmp.eq.s32.totalorder %v1710, 1
        %vm1727 = vcmp.eq.s32.totalorder %v1711, 1
        %vm1728 = vcmp.eq.s32.totalorder %v1712, 1
        %vm1729 = vcmp.eq.s32.totalorder %v1713, 1
        %1738 = vst [vmem:[#allocation1] ss:$2 sm:$0xff] %v1688
        %s1739 = scalar_lea.vmem [#allocation1], 16
        %1740 = vst [vmem:[%s1739] ss:$2 sm:$0xff] %v1689
        %s1741 = scalar_lea.vmem [#allocation1], 32
        %1742 = vst [vmem:[%s1741] ss:$2 sm:$0xff] %v1690
        %s1743 = scalar_lea.vmem [#allocation1], 48
        %1744 = vst [vmem:[%s1743] ss:$2 sm:$0xff] %v1691
        %v1745 = vld.sshfl [vmem:[#allocation1] sm:$0xff pattern:$0x75316420]
        %v1746 = vld.sshfl [vmem:[#allocation1 + $0x8] sm:$0xff pattern:$0x75316420]
        %v1747 = vld.sshfl [vmem:[#allocation1 + $0x10] sm:$0xff pattern:$0x75316420]
        %v1748 = vld.sshfl [vmem:[#allocation1 + $0x18] sm:$0xff pattern:$0x75316420]
        %v1749 = vld.sshfl [vmem:[#allocation1 + $0x20] sm:$0xff pattern:$0x75316420]
        %v1750 = vld.sshfl [vmem:[#allocation1 + $0x28] sm:$0xff pattern:$0x75316420]
        %v1751 = vld.sshfl [vmem:[#allocation1 + $0x30] sm:$0xff pattern:$0x75316420]
        %v1752 = vld.sshfl [vmem:[#allocation1 + $0x38] sm:$0xff pattern:$0x75316420]
        %1753 = vst [vmem:[#allocation1] ss:$2 sm:$0xff] %v1692
        %1754 = vst [vmem:[%s1739] ss:$2 sm:$0xff] %v1693
        %1755 = vst [vmem:[%s1741] ss:$2 sm:$0xff] %v1694
        %1756 = vst [vmem:[%s1743] ss:$2 sm:$0xff] %v1695
        %v1757 = vld.sshfl [vmem:[#allocation1] sm:$0xff pattern:$0x75316420]
        %v1758 = vld.sshfl [vmem:[#allocation1 + $0x8] sm:$0xff pattern:$0x75316420]
        %v1759 = vld.sshfl [vmem:[#allocation1 + $0x10] sm:$0xff pattern:$0x75316420]
        %v1760 = vld.sshfl [vmem:[#allocation1 + $0x18] sm:$0xff pattern:$0x75316420]
        %v1761 = vld.sshfl [vmem:[#allocation1 + $0x20] sm:$0xff pattern:$0x75316420]
        %v1762 = vld.sshfl [vmem:[#allocation1 + $0x28] sm:$0xff pattern:$0x75316420]
        %v1763 = vld.sshfl [vmem:[#allocation1 + $0x30] sm:$0xff pattern:$0x75316420]
        %v1764 = vld.sshfl [vmem:[#allocation1 + $0x38] sm:$0xff pattern:$0x75316420]
        %v1781 = vsel %vm1714, %v1745, 0.0
        %v1782 = vsel %vm1715, %v1746, 0.0
        %v1783 = vsel %vm1716, %v1747, 0.0
        %v1784 = vsel %vm1717, %v1748, 0.0
        %v1785 = vsel %vm1718, %v1749, 0.0
        %v1786 = vsel %vm1719, %v1750, 0.0
        %v1787 = vsel %vm1720, %v1751, 0.0
        %v1788 = vsel %vm1721, %v1752, 0.0
        %v1789 = vsel %vm1722, %v1757, 0.0
        %v1790 = vsel %vm1723, %v1758, 0.0
        %v1791 = vsel %vm1724, %v1759, 0.0
        %v1792 = vsel %vm1725, %v1760, 0.0
        %v1793 = vsel %vm1726, %v1761, 0.0
        %v1794 = vsel %vm1727, %v1762, 0.0
        %v1795 = vsel %vm1728, %v1763, 0.0
        %v1796 = vsel %vm1729, %v1764, 0.0
        %v1813 = vrot.slane %v1782, 6
        %v1814 = vrot.slane %v1783, 4
        %v1815 = vrot.slane %v1784, 2
        %v1816 = vrot.slane %v1786, 6
        %v1817 = vrot.slane %v1787, 4
        %v1818 = vrot.slane %v1788, 2
        %v1819 = vrot.slane %v1790, 6
        %v1820 = vrot.slane %v1791, 4
        %v1821 = vrot.slane %v1792, 2
        %v1822 = vrot.slane %v1794, 6
        %v1823 = vrot.slane %v1795, 4
        %v1824 = vrot.slane %v1796, 2
        %v1825 = vsel %vm931, %v1781, %v1813
        %v1826 = vsel %vm937, %v1814, %v1815
        %v1827 = vsel %vm939, %v1825, %v1826
        %v1828 = vsel %vm931, %v1785, %v1816
        %v1829 = vsel %vm937, %v1817, %v1818
        %v1830 = vsel %vm939, %v1828, %v1829
        %v1831 = vsel %vm931, %v1789, %v1819
        %v1832 = vsel %vm937, %v1820, %v1821
        %v1833 = vsel %vm939, %v1831, %v1832
        %v1834 = vsel %vm931, %v1793, %v1822
        %v1835 = vsel %vm937, %v1823, %v1824
        %v1836 = vsel %vm939, %v1834, %v1835
        %v1841 = vadd.f32 %v1514, %v1827
        %v1842 = vadd.f32 %v1515, %v1830
        %v1843 = vadd.f32 %v1516, %v1833
        %v1844 = vadd.f32 %v1517, %v1836
        %1845 = vst [vmem:[#allocation4] sm:$0xff] %v1841
        %1846 = vst [vmem:[#allocation4 + $0x8] sm:$0xff] %v1842
        %1847 = vst [vmem:[#allocation4 + $0x10] sm:$0xff] %v1843
        %1848 = vst [vmem:[#allocation4 + $0x18] sm:$0xff] %v1844
        %v1849 = vld [vmem:[#allocation5] sm:$0xff]
        %v1850 = vld [vmem:[#allocation5 + $0x8] sm:$0xff]
        %v1851 = vsel %vm1512, 1.0, 0.0
        %v1852 = vsel %vm1513, 1.0, 0.0
        %v1853 = vadd.f32 %v1849, %v1851
        %v1854 = vadd.f32 %v1850, %v1852
        %1855 = vst [vmem:[#allocation5] sm:$0xff] %v1853
        %1856 = vst [vmem:[#allocation5 + $0x8] sm:$0xff] %v1854
        %p1857 = scmp.eq.s32.totalorder %s22, 8
        // Predicated region
        $region114: #{tpu_custom_call.1} parent=96 // pred_check
          %p1858 = pneg %p1857
        $region115: #{tpu_custom_call.1} parent=96 // pred_check_branch
          %1860 = sbr.rel (%p1858) target = $region117
        $region116: #{tpu_custom_call.1} parent=96 // pred_region
          %v1861 = vld [vmem:[#allocation2] sm:$0xff]
          %v1862 = vld [vmem:[#allocation2 + $0x8] sm:$0xff]
          %1865 = vst [vmem:[#allocation1] ss:$4 sm:$0xff] %v1861
          %s1866 = scalar_lea.vmem [#allocation1], 32
          %1867 = vst [vmem:[%s1866] ss:$4 sm:$0xff] %v1862
          %v1868 = vld.sshfl [vmem:[#allocation1] sm:$0xff pattern:$0x73625140]
          %v1869 = vld.sshfl [vmem:[#allocation1 + $0x8] sm:$0xff pattern:$0x73625140]
          %v1870 = vld.sshfl [vmem:[#allocation1 + $0x10] sm:$0xff pattern:$0x73625140]
          %v1871 = vld.sshfl [vmem:[#allocation1 + $0x18] sm:$0xff pattern:$0x73625140]
          %v1872 = vld.sshfl [vmem:[#allocation1 + $0x20] sm:$0xff pattern:$0x73625140]
          %v1873 = vld.sshfl [vmem:[#allocation1 + $0x28] sm:$0xff pattern:$0x73625140]
          %v1874 = vld.sshfl [vmem:[#allocation1 + $0x30] sm:$0xff pattern:$0x73625140]
          %v1875 = vld.sshfl [vmem:[#allocation1 + $0x38] sm:$0xff pattern:$0x73625140]
          %v1884 = vsel %vm931, %v1868, 0.0
          %v1885 = vsel %vm931, %v1869, 0.0
          %v1886 = vadd.f32 %v1884, %v1885
          %v1887 = vsel %vm931, %v1870, 0.0
          %v1888 = vadd.f32 %v1886, %v1887
          %v1889 = vsel %vm931, %v1871, 0.0
          %v1890 = vadd.f32 %v1888, %v1889
          %v1891 = vsel %vm931, %v1872, 0.0
          %v1892 = vadd.f32 %v1890, %v1891
          %v1893 = vsel %vm931, %v1873, 0.0
          %v1894 = vadd.f32 %v1892, %v1893
          %v1895 = vsel %vm931, %v1874, 0.0
          %v1896 = vadd.f32 %v1894, %v1895
          %v1897 = vsel %vm931, %v1875, 0.0
          %v1898 = vadd.f32 %v1896, %v1897
          %1899 = vadd.xlane.f32.xlu0 %v1898
          %v1900 = vpop.xlane.xlu0 %1899
          %v1901 = vrot.slane %v1900, 4
          %v1902 = vadd.f32 %v1900, %v1901
          %v1903 = vrot.slane %v1902, 2
          %v1904 = vadd.f32 %v1902, %v1903
          %v1905 = vrot.slane %v1904, 1
          %v1906 = vadd.f32 %v1904, %v1905
          %s1907 = vtos %v1906
          %s1908 = ssub.f32 0.0, %s1907
          %v1909 = vld [vmem:[#allocation3] sm:$0xff]
          %v1910 = vld [vmem:[#allocation3 + $0x8] sm:$0xff]
          %1913 = vst [vmem:[#allocation1] ss:$4 sm:$0xff] %v1909
          %s1914 = scalar_lea.vmem [#allocation1], 32
          %1915 = vst [vmem:[%s1914] ss:$4 sm:$0xff] %v1910
          %v1916 = vld.sshfl [vmem:[#allocation1] sm:$0xff pattern:$0x73625140]
          %v1917 = vld.sshfl [vmem:[#allocation1 + $0x8] sm:$0xff pattern:$0x73625140]
          %v1918 = vld.sshfl [vmem:[#allocation1 + $0x10] sm:$0xff pattern:$0x73625140]
          %v1919 = vld.sshfl [vmem:[#allocation1 + $0x18] sm:$0xff pattern:$0x73625140]
          %v1920 = vld.sshfl [vmem:[#allocation1 + $0x20] sm:$0xff pattern:$0x73625140]
          %v1921 = vld.sshfl [vmem:[#allocation1 + $0x28] sm:$0xff pattern:$0x73625140]
          %v1922 = vld.sshfl [vmem:[#allocation1 + $0x30] sm:$0xff pattern:$0x73625140]
          %v1923 = vld.sshfl [vmem:[#allocation1 + $0x38] sm:$0xff pattern:$0x73625140]
          %v1932 = vsel %vm931, %v1916, 0.0
          %v1933 = vsel %vm931, %v1917, 0.0
          %v1934 = vadd.f32 %v1932, %v1933
          %v1935 = vsel %vm931, %v1918, 0.0
          %v1936 = vadd.f32 %v1934, %v1935
          %v1937 = vsel %vm931, %v1919, 0.0
          %v1938 = vadd.f32 %v1936, %v1937
          %v1939 = vsel %vm931, %v1920, 0.0
          %v1940 = vadd.f32 %v1938, %v1939
          %v1941 = vsel %vm931, %v1921, 0.0
          %v1942 = vadd.f32 %v1940, %v1941
          %v1943 = vsel %vm931, %v1922, 0.0
          %v1944 = vadd.f32 %v1942, %v1943
          %v1945 = vsel %vm931, %v1923, 0.0
          %v1946 = vadd.f32 %v1944, %v1945
          %1947 = vadd.xlane.f32.xlu0 %v1946
          %v1948 = vpop.xlane.xlu0 %1947
          %v1949 = vrot.slane %v1948, 4
          %v1950 = vadd.f32 %v1948, %v1949
          %v1951 = vrot.slane %v1950, 2
          %v1952 = vadd.f32 %v1950, %v1951
          %v1953 = vrot.slane %v1952, 1
          %v1954 = vadd.f32 %v1952, %v1953
          %s1955 = vtos %v1954
          %s1956 = ssub.f32 0.0, %s1955
          %v1957 = vld [vmem:[#allocation4] sm:$0xff]
          %v1958 = vld [vmem:[#allocation4 + $0x8] sm:$0xff]
          %v1959 = vld [vmem:[#allocation4 + $0x10] sm:$0xff]
          %v1960 = vld [vmem:[#allocation4 + $0x18] sm:$0xff]
          %1965 = vst [vmem:[#allocation1] ss:$4 sm:$0xff] %v1957
          %s1966 = scalar_lea.vmem [#allocation1], 32
          %1967 = vst [vmem:[%s1966] ss:$4 sm:$0xff] %v1958
          %v1968 = vld.sshfl [vmem:[#allocation1] sm:$0xff pattern:$0x73625140]
          %v1969 = vld.sshfl [vmem:[#allocation1 + $0x8] sm:$0xff pattern:$0x73625140]
          %v1970 = vld.sshfl [vmem:[#allocation1 + $0x10] sm:$0xff pattern:$0x73625140]
          %v1971 = vld.sshfl [vmem:[#allocation1 + $0x18] sm:$0xff pattern:$0x73625140]
          %v1972 = vld.sshfl [vmem:[#allocation1 + $0x20] sm:$0xff pattern:$0x73625140]
          %v1973 = vld.sshfl [vmem:[#allocation1 + $0x28] sm:$0xff pattern:$0x73625140]
          %v1974 = vld.sshfl [vmem:[#allocation1 + $0x30] sm:$0xff pattern:$0x73625140]
          %v1975 = vld.sshfl [vmem:[#allocation1 + $0x38] sm:$0xff pattern:$0x73625140]
          %1976 = vst [vmem:[#allocation1] ss:$4 sm:$0xff] %v1959
          %1977 = vst [vmem:[%s1966] ss:$4 sm:$0xff] %v1960
          %v1978 = vld.sshfl [vmem:[#allocation1] sm:$0xff pattern:$0x73625140]
          %v1979 = vld.sshfl [vmem:[#allocation1 + $0x8] sm:$0xff pattern:$0x73625140]
          %v1980 = vld.sshfl [vmem:[#allocation1 + $0x10] sm:$0xff pattern:$0x73625140]
          %v1981 = vld.sshfl [vmem:[#allocation1 + $0x18] sm:$0xff pattern:$0x73625140]
          %v1982 = vld.sshfl [vmem:[#allocation1 + $0x20] sm:$0xff pattern:$0x73625140]
          %v1983 = vld.sshfl [vmem:[#allocation1 + $0x28] sm:$0xff pattern:$0x73625140]
          %v1984 = vld.sshfl [vmem:[#allocation1 + $0x30] sm:$0xff pattern:$0x73625140]
          %v1985 = vld.sshfl [vmem:[#allocation1 + $0x38] sm:$0xff pattern:$0x73625140]
          %v2002 = vsel %vm931, %v1968, 0.0
          %v2003 = vsel %vm931, %v1969, 0.0
          %v2004 = vadd.f32 %v2002, %v2003
          %v2005 = vsel %vm931, %v1970, 0.0
          %v2006 = vadd.f32 %v2004, %v2005
          %v2007 = vsel %vm931, %v1971, 0.0
          %v2008 = vadd.f32 %v2006, %v2007
          %v2009 = vsel %vm931, %v1972, 0.0
          %v2010 = vadd.f32 %v2008, %v2009
          %v2011 = vsel %vm931, %v1973, 0.0
          %v2012 = vadd.f32 %v2010, %v2011
          %v2013 = vsel %vm931, %v1974, 0.0
          %v2014 = vadd.f32 %v2012, %v2013
          %v2015 = vsel %vm931, %v1975, 0.0
          %v2016 = vadd.f32 %v2014, %v2015
          %v2017 = vsel %vm931, %v1978, 0.0
          %v2018 = vadd.f32 %v2016, %v2017
          %v2019 = vsel %vm931, %v1979, 0.0
          %v2020 = vadd.f32 %v2018, %v2019
          %v2021 = vsel %vm931, %v1980, 0.0
          %v2022 = vadd.f32 %v2020, %v2021
          %v2023 = vsel %vm931, %v1981, 0.0
          %v2024 = vadd.f32 %v2022, %v2023
          %v2025 = vsel %vm931, %v1982, 0.0
          %v2026 = vadd.f32 %v2024, %v2025
          %v2027 = vsel %vm931, %v1983, 0.0
          %v2028 = vadd.f32 %v2026, %v2027
          %v2029 = vsel %vm931, %v1984, 0.0
          %v2030 = vadd.f32 %v2028, %v2029
          %v2031 = vsel %vm931, %v1985, 0.0
          %v2032 = vadd.f32 %v2030, %v2031
          %2033 = vadd.xlane.f32.xlu0 %v2032
          %v2034 = vpop.xlane.xlu0 %2033
          %v2035 = vrot.slane %v2034, 4
          %v2036 = vadd.f32 %v2034, %v2035
          %v2037 = vrot.slane %v2036, 2
          %v2038 = vadd.f32 %v2036, %v2037
          %v2039 = vrot.slane %v2038, 1
          %v2040 = vadd.f32 %v2038, %v2039
          %s2041 = vtos %v2040
          %v2042 = vld [vmem:[#allocation5] sm:$0xff]
          %v2043 = vld [vmem:[#allocation5 + $0x8] sm:$0xff]
          %2046 = vst [vmem:[#allocation1] ss:$4 sm:$0xff] %v2042
          %s2047 = scalar_lea.vmem [#allocation1], 32
          %2048 = vst [vmem:[%s2047] ss:$4 sm:$0xff] %v2043
          %v2049 = vld.sshfl [vmem:[#allocation1] sm:$0xff pattern:$0x73625140]
          %v2050 = vld.sshfl [vmem:[#allocation1 + $0x8] sm:$0xff pattern:$0x73625140]
          %v2051 = vld.sshfl [vmem:[#allocation1 + $0x10] sm:$0xff pattern:$0x73625140]
          %v2052 = vld.sshfl [vmem:[#allocation1 + $0x18] sm:$0xff pattern:$0x73625140]
          %v2053 = vld.sshfl [vmem:[#allocation1 + $0x20] sm:$0xff pattern:$0x73625140]
          %v2054 = vld.sshfl [vmem:[#allocation1 + $0x28] sm:$0xff pattern:$0x73625140]
          %v2055 = vld.sshfl [vmem:[#allocation1 + $0x30] sm:$0xff pattern:$0x73625140]
          %v2056 = vld.sshfl [vmem:[#allocation1 + $0x38] sm:$0xff pattern:$0x73625140]
          %v2065 = vsel %vm931, %v2049, 0.0
          %v2066 = vsel %vm931, %v2050, 0.0
          %v2067 = vadd.f32 %v2065, %v2066
          %v2068 = vsel %vm931, %v2051, 0.0
          %v2069 = vadd.f32 %v2067, %v2068
          %v2070 = vsel %vm931, %v2052, 0.0
          %v2071 = vadd.f32 %v2069, %v2070
          %v2072 = vsel %vm931, %v2053, 0.0
          %v2073 = vadd.f32 %v2071, %v2072
          %v2074 = vsel %vm931, %v2054, 0.0
          %v2075 = vadd.f32 %v2073, %v2074
          %v2076 = vsel %vm931, %v2055, 0.0
          %v2077 = vadd.f32 %v2075, %v2076
          %v2078 = vsel %vm931, %v2056, 0.0
          %v2079 = vadd.f32 %v2077, %v2078
          %2080 = vadd.xlane.f32.xlu0 %v2079
          %v2081 = vpop.xlane.xlu0 %2080
          %v2082 = vrot.slane %v2081, 4
          %v2083 = vadd.f32 %v2081, %v2082
          %v2084 = vrot.slane %v2083, 2
          %v2085 = vadd.f32 %v2083, %v2084
          %v2086 = vrot.slane %v2085, 1
          %v2087 = vadd.f32 %v2085, %v2086
          %s2088 = vtos %v2087
          %vm2089 = vcmp.eq.s32.totalorder %v1216, 0
          %vm2090 = vcmp.eq.s32.totalorder %v1216, 1
          %vm2091 = vcmp.eq.s32.totalorder %v1216, 2
          %vm2092 = vcmp.eq.s32.totalorder %v1216, 3
          %v2093 = vstv %s2088
          %v2094 = vsel %vm2092, %v2093, 0.0
          %v2095 = vstv %s2041
          %v2096 = vsel %vm2091, %v2095, %v2094
          %v2097 = vstv %s1956
          %v2098 = vsel %vm2090, %v2097, %v2096
          %v2099 = vstv %s1908
          %v2100 = vsel %vm2089, %v2099, %v2098
          %2101 = vst [vmem:[#allocation9] sm:$0xff] %v2100
        $region117: #{tpu_custom_call.1} parent=96 // pred_fallthru
          _
        // Predicated region
        $region118: #{tpu_custom_call.1} parent=96 // pred_check
          %p2102 = pneg %p197
        $region119: #{tpu_custom_call.1} parent=96 // pred_check_branch
          %2104 = sbr.rel (%p2102) target = $region121
        $region120: #{tpu_custom_call.1} parent=96 // pred_region
          %2106 = vsyncadd [#allocation10], 0
          %s2107 = smul.addr %s21, 8
          %s2108 = scalar_lea.hbm %s5, %s2107
          %s2110 = sshll.u32 [#allocation9], 4
          %s2111 = int_to_ptr.vmem [resolvable:$true] %s2110
          %s2112 = sshll.u32 %s2108, 4
          %s2113 = int_to_ptr.hbm [resolvable:$true] %s2112
          %2115 = dma.vmem_to_hbm [thread:$0]  %s2111, 128, %s2113, [#allocation10]
        $region121: #{tpu_custom_call.1} parent=96 // pred_fallthru
          _
        // Predicated region
        $region122: #{tpu_custom_call.1} parent=96 // pred_check
          %p2116 = pneg %p197
        $region123: #{tpu_custom_call.1} parent=96 // pred_check_branch
          %2118 = sbr.rel (%p2116) target = $region125
        $region124: #{tpu_custom_call.1} parent=96 // pred_region
          %2120 = dma.done [#allocation10], 128
        $region125: #{tpu_custom_call.1} parent=96 // pred_fallthru
          _
      $region97: #{tpu_custom_call.1} parent=5 // pred_fallthru
        _
      %p2121 = scmp.le.s32.totalorder 2, %s12
      // Predicated region
      $region126: #{tpu_custom_call.1} parent=5 // pred_check
        %p2122 = pneg %p2121
      $region127: #{tpu_custom_call.1} parent=5 // pred_check_branch
        %2124 = sbr.rel (%p2122) target = $region129
      $region128: #{tpu_custom_call.1} parent=5 // pred_region
        %s2125 = ssub.s32 %s12, 2
      $region129: #{tpu_custom_call.1} parent=5 // pred_fallthru
        _
    $region6: #{tpu_custom_call.1} parent=1 // loop_footer
      %s16 = sadd.s32 1, %s12
    $region7: #{tpu_custom_call.1} parent=1 // loop_footer_branch
      %11 = sbr.rel target = $region3
    $region8: #{tpu_custom_call.1} parent=1 // loop_exit
      _
    %2126 = vsyncpa [#allocation10], 1
    %s2127 = scalar_lea.sflag [#allocation10], 1
    %2128 = vsyncpa %s2127, 1

</llo_original>
